<compile_context>
chip_gen: v7x
topology: tpu7x:2x2x1
jax: 0.10.0
libtpu: 0.0.40
codegen_flags: <defaults>
</compile_context>

<pallas_src>
import functools
import math

import numpy as np
import jax
import jax.numpy as jnp
from jax.experimental import pallas as pl
from jax.experimental.pallas import tpu as pltpu


def _round_up(x, m):
    return (x + m - 1) // m * m


def _vmem_budget():
    """Generation-aware VMEM budget (bytes): ~75% of physical per-core VMEM."""
    cap = 64 * 1024 * 1024                       # conservative fallback (v7x per-TC)
    try:
        cap = int(pltpu.get_tpu_info().vmem_capacity_bytes)
    except Exception:
        pass
    return (cap * 3) // 4, cap


def _pick_tb(batch, tb_target):
    """Power-of-two batch tile in [16, tb_target]; keep >=2 batch grid steps (v7x)."""
    tb = 16
    while tb < min(tb_target, batch):
        tb *= 2
    tb = min(tb, tb_target)
    if (tb >= 32 and _round_up(batch, tb) // tb < 2
            and _round_up(batch, tb // 2) // (tb // 2) >= 2):
        tb //= 2                                  # split so both TCs get work on v7x
    return tb


# ---------------------------------------------------------------------------
# Shared per-layer compute: accumulating per-p(-pair) MXU dots, no basis scratch.
# ---------------------------------------------------------------------------
def _layer_body(x_ref, plo_ref, phi_ref, w_ref, b_ref, acc_ref, out_ref, *, gk, d_in_pad):
    """One ReLUKANLayer on one tile.

    x_ref   : (TB, D_in_pad)            activations (f32 or bf16; upcast for VPU math)
    plo_ref : (gk, D_in_pad)  f32       phase_low
    phi_ref : (gk, D_in_pad)  f32       phase_height
    w_ref   : (gk*D_in_pad, TN) dot dt  conv weight with r^2 folded in
    b_ref   : (1, TN)         f32       bias
    acc_ref : (TB, TN)        f32       accumulator (may alias out_ref when f32)
    out_ref : (TB, TN)                  output tile
    """
    dot_dtype = w_ref.dtype
    k_grp = max(1, 256 // d_in_pad)      # pair adjacent p's when D_in_pad==128 -> K=256
    first = True
    for p0 in range(0, gk, k_grp):
        p_hi = min(p0 + k_grp, gk)
        chunks = []
        for p in range(p0, p_hi):
            # Re-load x per p: bounds vreg live ranges (VMEM loads are nearly free).
            x = x_ref[...].astype(jnp.float32)
            x1 = jnp.maximum(x - plo_ref[p:p + 1, :], 0.0)      # relu(x - phase_low)
            x2 = jnp.maximum(phi_ref[p:p + 1, :] - x, 0.0)      # relu(phase_height - x)
            t = x1 * x2                                         # r^2 already in w
            chunks.append((t * t).astype(dot_dtype))
        basis = chunks[0] if len(chunks) == 1 else jnp.concatenate(chunks, axis=1)
        w_slab = w_ref[p0 * d_in_pad:p_hi * d_in_pad, :]
        contrib = jnp.dot(basis, w_slab, preferred_element_type=jnp.float32)
        if first:
            acc_ref[...] = contrib
            first = False
        else:
            acc_ref[...] += contrib
    out_ref[...] = (acc_ref[...] + b_ref[...]).astype(out_ref.dtype)


# ---------------------------------------------------------------------------
# Path A: fused whole-stack kernel (activations stay in VMEM between layers).
# ---------------------------------------------------------------------------
def _relukan_stack_kernel(x_ref, *args, num_layers, gk, d_in_pads):
    param_refs = args[:4 * num_layers]
    o_ref = args[4 * num_layers]
    act_refs = args[4 * num_layers + 1:]          # f32 intermediate activation scratch
    cur = x_ref
    for l in range(num_layers):
        plo, phi, w, b = param_refs[4 * l:4 * l + 4]
        out_ref = act_refs[l] if l < num_layers - 1 else o_ref
        # f32 intermediates/output double as the accumulator.
        _layer_body(cur, plo, phi, w, b, out_ref, out_ref, gk=gk, d_in_pad=d_in_pads[l])
        cur = out_ref


def _stack_vmem_bytes(tb, params):
    f32 = 4
    total = 2 * tb * int(params[0]["d_in_pad"]) * f32          # x tile (double-buffered)
    total += 2 * tb * int(params[-1]["d_out_pad"]) * f32       # output tile
    for p in params:
        dot_bytes = jnp.dtype(p["w_flat"].dtype).itemsize
        total += 2 * (2 * p["gk"] * p["d_in_pad"] * f32        # phase_low + phase_height
                      + p["gk"] * p["d_in_pad"] * p["d_out_pad"] * dot_bytes  # weights
                      + p["d_out_pad"] * f32)                  # bias
    for p in params[:-1]:
        total += tb * p["d_out_pad"] * f32                     # intermediate activations
    return total


def _relukan_stack(x_padded, params, *, tb, vmem_cap):
    num_layers = len(params)
    gk = int(params[0]["gk"])
    batch_pad = x_padded.shape[0]
    d_in_pads = tuple(int(p["d_in_pad"]) for p in params)
    d_out_last = int(params[-1]["d_out_pad"])

    in_specs = [pl.BlockSpec((tb, d_in_pads[0]), lambda i: (i, 0))]
    inputs = [x_padded]
    for p in params:
        gkp, dinp, doutp = int(p["gk"]), int(p["d_in_pad"]), int(p["d_out_pad"])
        in_specs += [
            pl.BlockSpec((gkp, dinp), lambda i: (0, 0)),          # phase_low  (resident)
            pl.BlockSpec((gkp, dinp), lambda i: (0, 0)),          # phase_height
            pl.BlockSpec((gkp * dinp, doutp), lambda i: (0, 0)),  # weight     (resident)
            pl.BlockSpec((1, doutp), lambda i: (0, 0)),           # bias
        ]
        inputs += [p["phase_low"], p["phase_height"], p["w_flat"], p["b"]]
    scratch = [pltpu.VMEM((tb, int(p["d_out_pad"])), jnp.float32) for p in params[:-1]]

    est = _stack_vmem_bytes(tb, params)
    kernel = functools.partial(_relukan_stack_kernel, num_layers=num_layers, gk=gk,
                               d_in_pads=d_in_pads)
    return pl.pallas_call(
        kernel,
        out_shape=jax.ShapeDtypeStruct((batch_pad, d_out_last), jnp.float32),
        grid_spec=pltpu.PrefetchScalarGridSpec(
            num_scalar_prefetch=0,
            grid=(batch_pad // tb,),
            in_specs=in_specs,
            out_specs=pl.BlockSpec((tb, d_out_last), lambda i: (i, 0)),
            scratch_shapes=scratch,
        ),
        compiler_params=pltpu.CompilerParams(
            dimension_semantics=("parallel",),
            vmem_limit_bytes=int(min(vmem_cap, max(32 * 1024 * 1024, est + 8 * 1024 * 1024))),
        ),
    )(*inputs)


# ---------------------------------------------------------------------------
# Path B: per-layer kernels (fallback when the fused stack exceeds the VMEM budget).
# ---------------------------------------------------------------------------
def _relukan_layer_kernel(x_ref, plo_ref, phi_ref, w_ref, b_ref, o_ref, acc_ref,
                          *, gk, d_in_pad):
    _layer_body(x_ref, plo_ref, phi_ref, w_ref, b_ref, acc_ref, o_ref,
                gk=gk, d_in_pad=d_in_pad)


def _layer_vmem_bytes(tb, tn, gk, d_in_pad, dot_bytes, x_bytes, out_bytes):
    f32 = 4
    return (2 * tb * d_in_pad * x_bytes          # activation tile (double-buffered)
            + 2 * 2 * gk * d_in_pad * f32        # phase_low / phase_height
            + 2 * gk * d_in_pad * tn * dot_bytes # weight tile (resident across batch axis)
            + 2 * tn * f32                       # bias
            + 2 * tb * tn * out_bytes            # output tile
            + tb * tn * f32)                     # f32 accumulator scratch


def relukan_layer(x_padded, layer, *, tb, out_dtype, vmem_budget, vmem_cap):
    gk = int(layer["gk"])
    d_in_pad = int(layer["d_in_pad"])
    d_out_pad = int(layer["d_out_pad"])
    w_flat, bias = layer["w_flat"], layer["b"]
    batch_pad = x_padded.shape[0]
    assert x_padded.shape == (batch_pad, d_in_pad), (x_padded.shape, d_in_pad)
    dot_bytes = jnp.dtype(w_flat.dtype).itemsize
    x_bytes = jnp.dtype(x_padded.dtype).itemsize
    out_bytes = jnp.dtype(out_dtype).itemsize

    # Lane-dense output tile, >=256 preferred (256-wide v6e/v7x MXU), dividing d_out_pad.
    tn = 128
    for cand in (512, 256):
        if d_out_pad % cand == 0:
            tn = cand
            break
    tb = min(tb, batch_pad)
    while tb > 16 and _layer_vmem_bytes(tb, tn, gk, d_in_pad, dot_bytes, x_bytes,
                                        out_bytes) > vmem_budget:
        tb //= 2
    while tn > 128 and _layer_vmem_bytes(tb, tn, gk, d_in_pad, dot_bytes, x_bytes,
                                         out_bytes) > vmem_budget:
        tn //= 2
    # TODO(synk): if gk*d_in_pad is so large that (tb=16, tn=128) still exceeds the
    # budget, a K-tiled reduction grid axis (accumulator + pl.when init/finalize) is needed.
    est = _layer_vmem_bytes(tb, tn, gk, d_in_pad, dot_bytes, x_bytes, out_bytes)

    grid = (d_out_pad // tn, batch_pad // tb)    # batch innermost -> weight tile not re-DMA'd
    kernel = functools.partial(_relukan_layer_kernel, gk=gk, d_in_pad=d_in_pad)
    return pl.pallas_call(
        kernel,
        out_shape=jax.ShapeDtypeStruct((batch_pad, d_out_pad), out_dtype),
        grid_spec=pltpu.PrefetchScalarGridSpec(
            num_scalar_prefetch=0,
            grid=grid,
            in_specs=[
                pl.BlockSpec((tb, d_in_pad), lambda j, i: (i, 0)),        # x tile
                pl.BlockSpec((gk, d_in_pad), lambda j, i: (0, 0)),        # phase_low
                pl.BlockSpec((gk, d_in_pad), lambda j, i: (0, 0)),        # phase_height
                pl.BlockSpec((gk * d_in_pad, tn), lambda j, i: (0, j)),   # weight
                pl.BlockSpec((1, tn), lambda j, i: (0, j)),               # bias
            ],
            out_specs=pl.BlockSpec((tb, tn), lambda j, i: (i, j)),
            scratch_shapes=[pltpu.VMEM((tb, tn), jnp.float32)],           # f32 accumulator
        ),
        compiler_params=pltpu.CompilerParams(
            dimension_semantics=("parallel", "parallel"),
            vmem_limit_bytes=int(min(vmem_cap, max(32 * 1024 * 1024, est + 8 * 1024 * 1024))),
        ),
    )(x_padded, layer["phase_low"], layer["phase_height"], w_flat, bias)


# ---------------------------------------------------------------------------
# Parameters, forward, reference.
# ---------------------------------------------------------------------------
def init_relukan_params(key, dimensions, g, k, dot_dtype=jnp.bfloat16):
    """Deterministic synthetic parameters mirroring ReLUKANLayer.__init__.

    Kernel layout per layer (zero-padded lane-dense, r^2 folded into the weight):
      phase_low / phase_height : (g+k, d_in_pad)               f32
      w_flat                   : ((g+k)*d_in_pad, d_out_pad)   dot_dtype
      b                        : (1, d_out_pad)                f32
    Unpadded / unfolded f32 copies (ref_*) feed only the pure-JAX reference.
    """
    params = []
    gk = g + k
    r = 4.0 * g * g / ((k + 1) * (k + 1))
    for i in range(len(dimensions) - 1):
        d_in, d_out = dimensions[i], dimensions[i + 1]
        d_in_pad, d_out_pad = _round_up(d_in, 128), _round_up(d_out, 128)

        phase_low = jnp.broadcast_to(
            jnp.asarray(np.arange(-k, g) / g, dtype=jnp.float32)[:, None], (gk, d_in))
        phase_height = phase_low + (k + 1) / g

        key, wk, bk = jax.random.split(key, 3)
        fan_in = 1 * gk * d_in                       # Conv2d(1, d_out, (gk, d_in)) fan-in
        bound = 1.0 / math.sqrt(fan_in)
        w_torch = jax.random.uniform(wk, (d_out, 1, gk, d_in), jnp.float32,
                                     minval=-bound, maxval=bound)
        bias = jax.random.uniform(bk, (1, d_out), jnp.float32,
                                  minval=-bound, maxval=bound)

        w_g = jnp.transpose(w_torch[:, 0], (1, 2, 0))            # (gk, d_in, d_out)
        w_folded = w_g * (r * r)                                 # fold r^2 into the weight
        w_pad = jnp.pad(w_folded, ((0, 0), (0, d_in_pad - d_in), (0, d_out_pad - d_out)))
        w_flat = w_pad.reshape(gk * d_in_pad, d_out_pad).astype(dot_dtype)

        params.append(dict(
            phase_low=jnp.pad(phase_low, ((0, 0), (0, d_in_pad - d_in))),
            phase_height=jnp.pad(phase_height, ((0, 0), (0, d_in_pad - d_in))),
            w_flat=w_flat,
            b=jnp.pad(bias, ((0, 0), (0, d_out_pad - d_out))),
            gk=gk, d_in=d_in, d_out=d_out, d_in_pad=d_in_pad, d_out_pad=d_out_pad, r=r,
            ref_w=w_g, ref_b=bias, ref_phase_low=phase_low, ref_phase_height=phase_height,
        ))
    return params


def relukan_forward(x, params, *, fuse=None):
    """ReLUKAN.forward via Pallas kernels: (B, dims[0]) -> (B, dims[-1]) f32."""
    batch = x.shape[0]
    assert x.shape[1] == params[0]["d_in"]
    budget, cap = _vmem_budget()
    tb_target = 512 if cap >= 96 * 1024 * 1024 else 256   # bigger tiles on v5e/v6e
    tb = _pick_tb(batch, tb_target)
    batch_pad = _round_up(batch, tb)
    x = jnp.pad(x.astype(jnp.float32),
                ((0, batch_pad - batch), (0, params[0]["d_in_pad"] - x.shape[1])))

    if fuse is None:
        fuse = _stack_vmem_bytes(tb, params) <= budget
    if fuse:
        out = _relukan_stack(x, params, tb=tb, vmem_cap=cap)
    else:
        # Per-layer path: padded activations chain between layers (layer i's d_out_pad
        # == layer i+1's d_in_pad; padded columns stay exactly zero). Hidden layers
        # chain in bf16 when the dot is bf16 to halve inter-layer HBM traffic.
        dot_is_bf16 = params[0]["w_flat"].dtype == jnp.bfloat16
        for li, layer in enumerate(params):
            last = li == len(params) - 1
            out_dtype = jnp.float32 if (last or not dot_is_bf16) else jnp.bfloat16
            x = relukan_layer(x, layer, tb=tb, out_dtype=out_dtype,
                              vmem_budget=budget, vmem_cap=cap)
        out = x
    return out[:batch, :params[-1]["d_out"]]


def relukan_reference(x, params):
    """Pure-JAX f32 replica of the PyTorch forward (unpadded, r applied explicitly)."""
    x = x.astype(jnp.float32)
    for p in params:
        plo, phi, r = p["ref_phase_low"], p["ref_phase_height"], p["r"]
        xe = x[:, None, :]                                          # (B, 1, d_in)
        x1 = jnp.maximum(xe - plo[None], 0.0)
        x2 = jnp.maximum(phi[None] - xe, 0.0)
        basis = (x1 * x2 * r) ** 2                                  # (B, gk, d_in)
        x = jnp.einsum("bpi,pio->bo", basis, p["ref_w"]) + p["ref_b"]
    return x


if __name__ == "__main__":
    # Small synthetic config consistent with the module: dimensions list + (g, k).
    dimensions = [8, 16, 4]
    g, k = 3, 2
    batch = 2

    key = jax.random.PRNGKey(0)
    key, pkey, xkey = jax.random.split(key, 3)
    x = jax.random.normal(xkey, (batch, dimensions[0]), dtype=jnp.float32)

    params_f32 = init_relukan_params(pkey, dimensions, g, k, dot_dtype=jnp.float32)
    ref = relukan_reference(x, params_f32)

    # Fused-stack path, f32 at the dot: strict check against the JAX reference.
    out = jax.block_until_ready(relukan_forward(x, params_f32))
    assert out.shape == (batch, dimensions[-1]), out.shape
    np.testing.assert_allclose(np.asarray(out), np.asarray(ref), rtol=1e-4, atol=1e-4)

    # Per-layer fallback path, f32: strict check (exercises the unfused kernels).
    out_u = jax.block_until_ready(relukan_forward(x, params_f32, fuse=False))
    np.testing.assert_allclose(np.asarray(out_u), np.asarray(ref), rtol=1e-4, atol=1e-4)

    # bf16-at-the-dot (default; f32 accumulation): fused path, loose check.
    params_bf16 = init_relukan_params(pkey, dimensions, g, k, dot_dtype=jnp.bfloat16)
    out_bf = jax.block_until_ready(relukan_forward(x, params_bf16))
    assert out_bf.shape == (batch, dimensions[-1]), out_bf.shape
    np.testing.assert_allclose(np.asarray(out_bf), np.asarray(ref), rtol=5e-2, atol=5e-2)

    # bf16 per-layer path with bf16 activation chaining: extra rounding between layers.
    out_bfu = jax.block_until_ready(relukan_forward(x, params_bf16, fuse=False))
    np.testing.assert_allclose(np.asarray(out_bfu), np.asarray(ref), rtol=1e-1, atol=1e-1)

    print("KERNEL_OK")
</pallas_src>

<mosaic_0001>
module attributes {stable_mosaic.version = 11 : i64} {
  func.func @_relukan_stack_kernel(%arg0: i32, %arg1: memref<16x128xf32, #tpu.memory_space<vmem>>, %arg2: memref<5x128xf32, #tpu.memory_space<vmem>>, %arg3: memref<5x128xf32, #tpu.memory_space<vmem>>, %arg4: memref<640x128xf32, #tpu.memory_space<vmem>>, %arg5: memref<1x128xf32, #tpu.memory_space<vmem>>, %arg6: memref<5x128xf32, #tpu.memory_space<vmem>>, %arg7: memref<5x128xf32, #tpu.memory_space<vmem>>, %arg8: memref<640x128xf32, #tpu.memory_space<vmem>>, %arg9: memref<1x128xf32, #tpu.memory_space<vmem>>, %arg10: memref<16x128xf32, #tpu.memory_space<vmem>>, %arg11: memref<16x128xf32, #tpu.memory_space<vmem>>) attributes {dimension_semantics = [#tpu.dimension_semantics<parallel>], iteration_bounds = array<i64: 1>, scalar_prefetch = 0 : i64, scratch_operands = 1 : i64, tpu.core_type = #tpu.core_type<tc>, window_params = [{transform_indices = @transform_0, window_bounds = array<i64: 16, 128>}, {pipeline_mode = #tpu.pipeline_mode<synchronous>, transform_indices = @transform_1, window_bounds = array<i64: 5, 128>}, {pipeline_mode = #tpu.pipeline_mode<synchronous>, transform_indices = @transform_2, window_bounds = array<i64: 5, 128>}, {pipeline_mode = #tpu.pipeline_mode<synchronous>, transform_indices = @transform_3, window_bounds = array<i64: 640, 128>}, {pipeline_mode = #tpu.pipeline_mode<synchronous>, transform_indices = @transform_4, window_bounds = array<i64: 1, 128>}, {pipeline_mode = #tpu.pipeline_mode<synchronous>, transform_indices = @transform_5, window_bounds = array<i64: 5, 128>}, {pipeline_mode = #tpu.pipeline_mode<synchronous>, transform_indices = @transform_6, window_bounds = array<i64: 5, 128>}, {pipeline_mode = #tpu.pipeline_mode<synchronous>, transform_indices = @transform_7, window_bounds = array<i64: 640, 128>}, {pipeline_mode = #tpu.pipeline_mode<synchronous>, transform_indices = @transform_8, window_bounds = array<i64: 1, 128>}, {transform_indices = @transform_9, window_bounds = array<i64: 16, 128>}]} {
    %c0 = arith.constant 0 : index
    %c0_0 = arith.constant 0 : index
    %0 = vector.load %arg1[%c0, %c0_0] : memref<16x128xf32, #tpu.memory_space<vmem>>, vector<16x128xf32>
    %c0_1 = arith.constant 0 : index
    %c0_2 = arith.constant 0 : index
    %1 = vector.load %arg2[%c0_1, %c0_2] : memref<5x128xf32, #tpu.memory_space<vmem>>, vector<1x128xf32>
    %2 = vector.broadcast %1 : vector<1x128xf32> to vector<16x128xf32>
    %3 = arith.subf %0, %2 : vector<16x128xf32>
    %cst = arith.constant 0.000000e+00 : f32
    %4 = vector.broadcast %cst : f32 to vector<16x128xf32>
    %5 = arith.maximumf %3, %4 : vector<16x128xf32>
    %c0_3 = arith.constant 0 : index
    %c0_4 = arith.constant 0 : index
    %6 = vector.load %arg3[%c0_3, %c0_4] : memref<5x128xf32, #tpu.memory_space<vmem>>, vector<1x128xf32>
    %7 = vector.broadcast %6 : vector<1x128xf32> to vector<16x128xf32>
    %8 = arith.subf %7, %0 : vector<16x128xf32>
    %cst_5 = arith.constant 0.000000e+00 : f32
    %9 = vector.broadcast %cst_5 : f32 to vector<16x128xf32>
    %10 = arith.maximumf %8, %9 : vector<16x128xf32>
    %11 = arith.mulf %5, %10 : vector<16x128xf32>
    %12 = arith.mulf %11, %11 : vector<16x128xf32>
    %c0_6 = arith.constant 0 : index
    %c0_7 = arith.constant 0 : index
    %13 = vector.load %arg1[%c0_6, %c0_7] : memref<16x128xf32, #tpu.memory_space<vmem>>, vector<16x128xf32>
    %c1 = arith.constant 1 : index
    %c0_8 = arith.constant 0 : index
    %14 = vector.load %arg2[%c1, %c0_8] : memref<5x128xf32, #tpu.memory_space<vmem>>, vector<1x128xf32>
    %15 = vector.broadcast %14 : vector<1x128xf32> to vector<16x128xf32>
    %16 = arith.subf %13, %15 : vector<16x128xf32>
    %cst_9 = arith.constant 0.000000e+00 : f32
    %17 = vector.broadcast %cst_9 : f32 to vector<16x128xf32>
    %18 = arith.maximumf %16, %17 : vector<16x128xf32>
    %c1_10 = arith.constant 1 : index
    %c0_11 = arith.constant 0 : index
    %19 = vector.load %arg3[%c1_10, %c0_11] : memref<5x128xf32, #tpu.memory_space<vmem>>, vector<1x128xf32>
    %20 = vector.broadcast %19 : vector<1x128xf32> to vector<16x128xf32>
    %21 = arith.subf %20, %13 : vector<16x128xf32>
    %cst_12 = arith.constant 0.000000e+00 : f32
    %22 = vector.broadcast %cst_12 : f32 to vector<16x128xf32>
    %23 = arith.maximumf %21, %22 : vector<16x128xf32>
    %24 = arith.mulf %18, %23 : vector<16x128xf32>
    %25 = arith.mulf %24, %24 : vector<16x128xf32>
    %26 = tpu.concatenate %12, %25 in 1 : vector<16x128xf32>, vector<16x128xf32> -> vector<16x256xf32>
    %c0_13 = arith.constant 0 : index
    %c0_14 = arith.constant 0 : index
    %27 = vector.load %arg4[%c0_13, %c0_14] : memref<640x128xf32, #tpu.memory_space<vmem>>, vector<256x128xf32>
    %cst_15 = arith.constant dense<0.000000e+00> : vector<16x128xf32>
    %28 = tpu.matmul %26, %27, %cst_15 {dimension_numbers = #tpu.dot_dimension_numbers<[1], [0], [0], [1], [0, 0, 1, 1], [], []>} : vector<16x256xf32>, vector<256x128xf32>, vector<16x128xf32> -> vector<16x128xf32>
    %c0_16 = arith.constant 0 : index
    %c0_17 = arith.constant 0 : index
    %29 = vector.load %arg11[%c0_16, %c0_17] : memref<16x128xf32, #tpu.memory_space<vmem>>, vector<16x128xf32>
    tpu.vector_store %arg11[%c0_16, %c0_17], %28 {strides = array<i32>} : memref<16x128xf32, #tpu.memory_space<vmem>>, vector<16x128xf32>,
    %c0_18 = arith.constant 0 : index
    %c0_19 = arith.constant 0 : index
    %30 = vector.load %arg1[%c0_18, %c0_19] : memref<16x128xf32, #tpu.memory_space<vmem>>, vector<16x128xf32>
    %c2 = arith.constant 2 : index
    %c0_20 = arith.constant 0 : index
    %31 = vector.load %arg2[%c2, %c0_20] : memref<5x128xf32, #tpu.memory_space<vmem>>, vector<1x128xf32>
    %32 = vector.broadcast %31 : vector<1x128xf32> to vector<16x128xf32>
    %33 = arith.subf %30, %32 : vector<16x128xf32>
    %cst_21 = arith.constant 0.000000e+00 : f32
    %34 = vector.broadcast %cst_21 : f32 to vector<16x128xf32>
    %35 = arith.maximumf %33, %34 : vector<16x128xf32>
    %c2_22 = arith.constant 2 : index
    %c0_23 = arith.constant 0 : index
    %36 = vector.load %arg3[%c2_22, %c0_23] : memref<5x128xf32, #tpu.memory_space<vmem>>, vector<1x128xf32>
    %37 = vector.broadcast %36 : vector<1x128xf32> to vector<16x128xf32>
    %38 = arith.subf %37, %30 : vector<16x128xf32>
    %cst_24 = arith.constant 0.000000e+00 : f32
    %39 = vector.broadcast %cst_24 : f32 to vector<16x128xf32>
    %40 = arith.maximumf %38, %39 : vector<16x128xf32>
    %41 = arith.mulf %35, %40 : vector<16x128xf32>
    %42 = arith.mulf %41, %41 : vector<16x128xf32>
    %c0_25 = arith.constant 0 : index
    %c0_26 = arith.constant 0 : index
    %43 = vector.load %arg1[%c0_25, %c0_26] : memref<16x128xf32, #tpu.memory_space<vmem>>, vector<16x128xf32>
    %c3 = arith.constant 3 : index
    %c0_27 = arith.constant 0 : index
    %44 = vector.load %arg2[%c3, %c0_27] : memref<5x128xf32, #tpu.memory_space<vmem>>, vector<1x128xf32>
    %45 = vector.broadcast %44 : vector<1x128xf32> to vector<16x128xf32>
    %46 = arith.subf %43, %45 : vector<16x128xf32>
    %cst_28 = arith.constant 0.000000e+00 : f32
    %47 = vector.broadcast %cst_28 : f32 to vector<16x128xf32>
    %48 = arith.maximumf %46, %47 : vector<16x128xf32>
    %c3_29 = arith.constant 3 : index
    %c0_30 = arith.constant 0 : index
    %49 = vector.load %arg3[%c3_29, %c0_30] : memref<5x128xf32, #tpu.memory_space<vmem>>, vector<1x128xf32>
    %50 = vector.broadcast %49 : vector<1x128xf32> to vector<16x128xf32>
    %51 = arith.subf %50, %43 : vector<16x128xf32>
    %cst_31 = arith.constant 0.000000e+00 : f32
    %52 = vector.broadcast %cst_31 : f32 to vector<16x128xf32>
    %53 = arith.maximumf %51, %52 : vector<16x128xf32>
    %54 = arith.mulf %48, %53 : vector<16x128xf32>
    %55 = arith.mulf %54, %54 : vector<16x128xf32>
    %56 = tpu.concatenate %42, %55 in 1 : vector<16x128xf32>, vector<16x128xf32> -> vector<16x256xf32>
    %c256 = arith.constant 256 : index
    %c0_32 = arith.constant 0 : index
    %57 = vector.load %arg4[%c256, %c0_32] : memref<640x128xf32, #tpu.memory_space<vmem>>, vector<256x128xf32>
    %cst_33 = arith.constant dense<0.000000e+00> : vector<16x128xf32>
    %58 = tpu.matmul %56, %57, %cst_33 {dimension_numbers = #tpu.dot_dimension_numbers<[1], [0], [0], [1], [0, 0, 1, 1], [], []>} : vector<16x256xf32>, vector<256x128xf32>, vector<16x128xf32> -> vector<16x128xf32>
    %c0_34 = arith.constant 0 : index
    %c0_35 = arith.constant 0 : index
    %59 = vector.load %arg11[%c0_34, %c0_35] : memref<16x128xf32, #tpu.memory_space<vmem>>, vector<16x128xf32>
    %60 = arith.addf %59, %58 : vector<16x128xf32>
    %c0_36 = arith.constant 0 : index
    %c0_37 = arith.constant 0 : index
    %61 = vector.load %arg11[%c0_36, %c0_37] : memref<16x128xf32, #tpu.memory_space<vmem>>, vector<16x128xf32>
    tpu.vector_store %arg11[%c0_36, %c0_37], %60 {strides = array<i32>} : memref<16x128xf32, #tpu.memory_space<vmem>>, vector<16x128xf32>,
    %c0_38 = arith.constant 0 : index
    %c0_39 = arith.constant 0 : index
    %62 = vector.load %arg1[%c0_38, %c0_39] : memref<16x128xf32, #tpu.memory_space<vmem>>, vector<16x128xf32>
    %c4 = arith.constant 4 : index
    %c0_40 = arith.constant 0 : index
    %63 = vector.load %arg2[%c4, %c0_40] : memref<5x128xf32, #tpu.memory_space<vmem>>, vector<1x128xf32>
    %64 = vector.broadcast %63 : vector<1x128xf32> to vector<16x128xf32>
    %65 = arith.subf %62, %64 : vector<16x128xf32>
    %cst_41 = arith.constant 0.000000e+00 : f32
    %66 = vector.broadcast %cst_41 : f32 to vector<16x128xf32>
    %67 = arith.maximumf %65, %66 : vector<16x128xf32>
    %c4_42 = arith.constant 4 : index
    %c0_43 = arith.constant 0 : index
    %68 = vector.load %arg3[%c4_42, %c0_43] : memref<5x128xf32, #tpu.memory_space<vmem>>, vector<1x128xf32>
    %69 = vector.broadcast %68 : vector<1x128xf32> to vector<16x128xf32>
    %70 = arith.subf %69, %62 : vector<16x128xf32>
    %cst_44 = arith.constant 0.000000e+00 : f32
    %71 = vector.broadcast %cst_44 : f32 to vector<16x128xf32>
    %72 = arith.maximumf %70, %71 : vector<16x128xf32>
    %73 = arith.mulf %67, %72 : vector<16x128xf32>
    %74 = arith.mulf %73, %73 : vector<16x128xf32>
    %c512 = arith.constant 512 : index
    %c0_45 = arith.constant 0 : index
    %75 = vector.load %arg4[%c512, %c0_45] : memref<640x128xf32, #tpu.memory_space<vmem>>, vector<128x128xf32>
    %cst_46 = arith.constant dense<0.000000e+00> : vector<16x128xf32>
    %76 = tpu.matmul %74, %75, %cst_46 {dimension_numbers = #tpu.dot_dimension_numbers<[1], [0], [0], [1], [0, 0, 1, 1], [], []>} : vector<16x128xf32>, vector<128x128xf32>, vector<16x128xf32> -> vector<16x128xf32>
    %c0_47 = arith.constant 0 : index
    %c0_48 = arith.constant 0 : index
    %77 = vector.load %arg11[%c0_47, %c0_48] : memref<16x128xf32, #tpu.memory_space<vmem>>, vector<16x128xf32>
    %78 = arith.addf %77, %76 : vector<16x128xf32>
    %c0_49 = arith.constant 0 : index
    %c0_50 = arith.constant 0 : index
    %79 = vector.load %arg11[%c0_49, %c0_50] : memref<16x128xf32, #tpu.memory_space<vmem>>, vector<16x128xf32>
    tpu.vector_store %arg11[%c0_49, %c0_50], %78 {strides = array<i32>} : memref<16x128xf32, #tpu.memory_space<vmem>>, vector<16x128xf32>,
    %c0_51 = arith.constant 0 : index
    %c0_52 = arith.constant 0 : index
    %80 = vector.load %arg11[%c0_51, %c0_52] : memref<16x128xf32, #tpu.memory_space<vmem>>, vector<16x128xf32>
    %c0_53 = arith.constant 0 : index
    %c0_54 = arith.constant 0 : index
    %81 = vector.load %arg5[%c0_53, %c0_54] : memref<1x128xf32, #tpu.memory_space<vmem>>, vector<1x128xf32>
    %82 = vector.broadcast %81 : vector<1x128xf32> to vector<16x128xf32>
    %83 = arith.addf %80, %82 : vector<16x128xf32>
    %c0_55 = arith.constant 0 : index
    %c0_56 = arith.constant 0 : index
    %84 = vector.load %arg11[%c0_55, %c0_56] : memref<16x128xf32, #tpu.memory_space<vmem>>, vector<16x128xf32>
    tpu.vector_store %arg11[%c0_55, %c0_56], %83 {strides = array<i32>} : memref<16x128xf32, #tpu.memory_space<vmem>>, vector<16x128xf32>,
    %c0_57 = arith.constant 0 : index
    %c0_58 = arith.constant 0 : index
    %85 = vector.load %arg11[%c0_57, %c0_58] : memref<16x128xf32, #tpu.memory_space<vmem>>, vector<16x128xf32>
    %c0_59 = arith.constant 0 : index
    %c0_60 = arith.constant 0 : index
    %86 = vector.load %arg6[%c0_59, %c0_60] : memref<5x128xf32, #tpu.memory_space<vmem>>, vector<1x128xf32>
    %87 = vector.broadcast %86 : vector<1x128xf32> to vector<16x128xf32>
    %88 = arith.subf %85, %87 : vector<16x128xf32>
    %cst_61 = arith.constant 0.000000e+00 : f32
    %89 = vector.broadcast %cst_61 : f32 to vector<16x128xf32>
    %90 = arith.maximumf %88, %89 : vector<16x128xf32>
    %c0_62 = arith.constant 0 : index
    %c0_63 = arith.constant 0 : index
    %91 = vector.load %arg7[%c0_62, %c0_63] : memref<5x128xf32, #tpu.memory_space<vmem>>, vector<1x128xf32>
    %92 = vector.broadcast %91 : vector<1x128xf32> to vector<16x128xf32>
    %93 = arith.subf %92, %85 : vector<16x128xf32>
    %cst_64 = arith.constant 0.000000e+00 : f32
    %94 = vector.broadcast %cst_64 : f32 to vector<16x128xf32>
    %95 = arith.maximumf %93, %94 : vector<16x128xf32>
    %96 = arith.mulf %90, %95 : vector<16x128xf32>
    %97 = arith.mulf %96, %96 : vector<16x128xf32>
    %c0_65 = arith.constant 0 : index
    %c0_66 = arith.constant 0 : index
    %98 = vector.load %arg11[%c0_65, %c0_66] : memref<16x128xf32, #tpu.memory_space<vmem>>, vector<16x128xf32>
    %c1_67 = arith.constant 1 : index
    %c0_68 = arith.constant 0 : index
    %99 = vector.load %arg6[%c1_67, %c0_68] : memref<5x128xf32, #tpu.memory_space<vmem>>, vector<1x128xf32>
    %100 = vector.broadcast %99 : vector<1x128xf32> to vector<16x128xf32>
    %101 = arith.subf %98, %100 : vector<16x128xf32>
    %cst_69 = arith.constant 0.000000e+00 : f32
    %102 = vector.broadcast %cst_69 : f32 to vector<16x128xf32>
    %103 = arith.maximumf %101, %102 : vector<16x128xf32>
    %c1_70 = arith.constant 1 : index
    %c0_71 = arith.constant 0 : index
    %104 = vector.load %arg7[%c1_70, %c0_71] : memref<5x128xf32, #tpu.memory_space<vmem>>, vector<1x128xf32>
    %105 = vector.broadcast %104 : vector<1x128xf32> to vector<16x128xf32>
    %106 = arith.subf %105, %98 : vector<16x128xf32>
    %cst_72 = arith.constant 0.000000e+00 : f32
    %107 = vector.broadcast %cst_72 : f32 to vector<16x128xf32>
    %108 = arith.maximumf %106, %107 : vector<16x128xf32>
    %109 = arith.mulf %103, %108 : vector<16x128xf32>
    %110 = arith.mulf %109, %109 : vector<16x128xf32>
    %111 = tpu.concatenate %97, %110 in 1 : vector<16x128xf32>, vector<16x128xf32> -> vector<16x256xf32>
    %c0_73 = arith.constant 0 : index
    %c0_74 = arith.constant 0 : index
    %112 = vector.load %arg8[%c0_73, %c0_74] : memref<640x128xf32, #tpu.memory_space<vmem>>, vector<256x128xf32>
    %cst_75 = arith.constant dense<0.000000e+00> : vector<16x128xf32>
    %113 = tpu.matmul %111, %112, %cst_75 {dimension_numbers = #tpu.dot_dimension_numbers<[1], [0], [0], [1], [0, 0, 1, 1], [], []>} : vector<16x256xf32>, vector<256x128xf32>, vector<16x128xf32> -> vector<16x128xf32>
    %c0_76 = arith.constant 0 : index
    %c0_77 = arith.constant 0 : index
    %114 = vector.load %arg10[%c0_76, %c0_77] : memref<16x128xf32, #tpu.memory_space<vmem>>, vector<16x128xf32>
    tpu.vector_store %arg10[%c0_76, %c0_77], %113 {strides = array<i32>} : memref<16x128xf32, #tpu.memory_space<vmem>>, vector<16x128xf32>,
    %c0_78 = arith.constant 0 : index
    %c0_79 = arith.constant 0 : index
    %115 = vector.load %arg11[%c0_78, %c0_79] : memref<16x128xf32, #tpu.memory_space<vmem>>, vector<16x128xf32>
    %c2_80 = arith.constant 2 : index
    %c0_81 = arith.constant 0 : index
    %116 = vector.load %arg6[%c2_80, %c0_81] : memref<5x128xf32, #tpu.memory_space<vmem>>, vector<1x128xf32>
    %117 = vector.broadcast %116 : vector<1x128xf32> to vector<16x128xf32>
    %118 = arith.subf %115, %117 : vector<16x128xf32>
    %cst_82 = arith.constant 0.000000e+00 : f32
    %119 = vector.broadcast %cst_82 : f32 to vector<16x128xf32>
    %120 = arith.maximumf %118, %119 : vector<16x128xf32>
    %c2_83 = arith.constant 2 : index
    %c0_84 = arith.constant 0 : index
    %121 = vector.load %arg7[%c2_83, %c0_84] : memref<5x128xf32, #tpu.memory_space<vmem>>, vector<1x128xf32>
    %122 = vector.broadcast %121 : vector<1x128xf32> to vector<16x128xf32>
    %123 = arith.subf %122, %115 : vector<16x128xf32>
    %cst_85 = arith.constant 0.000000e+00 : f32
    %124 = vector.broadcast %cst_85 : f32 to vector<16x128xf32>
    %125 = arith.maximumf %123, %124 : vector<16x128xf32>
    %126 = arith.mulf %120, %125 : vector<16x128xf32>
    %127 = arith.mulf %126, %126 : vector<16x128xf32>
    %c0_86 = arith.constant 0 : index
    %c0_87 = arith.constant 0 : index
    %128 = vector.load %arg11[%c0_86, %c0_87] : memref<16x128xf32, #tpu.memory_space<vmem>>, vector<16x128xf32>
    %c3_88 = arith.constant 3 : index
    %c0_89 = arith.constant 0 : index
    %129 = vector.load %arg6[%c3_88, %c0_89] : memref<5x128xf32, #tpu.memory_space<vmem>>, vector<1x128xf32>
    %130 = vector.broadcast %129 : vector<1x128xf32> to vector<16x128xf32>
    %131 = arith.subf %128, %130 : vector<16x128xf32>
    %cst_90 = arith.constant 0.000000e+00 : f32
    %132 = vector.broadcast %cst_90 : f32 to vector<16x128xf32>
    %133 = arith.maximumf %131, %132 : vector<16x128xf32>
    %c3_91 = arith.constant 3 : index
    %c0_92 = arith.constant 0 : index
    %134 = vector.load %arg7[%c3_91, %c0_92] : memref<5x128xf32, #tpu.memory_space<vmem>>, vector<1x128xf32>
    %135 = vector.broadcast %134 : vector<1x128xf32> to vector<16x128xf32>
    %136 = arith.subf %135, %128 : vector<16x128xf32>
    %cst_93 = arith.constant 0.000000e+00 : f32
    %137 = vector.broadcast %cst_93 : f32 to vector<16x128xf32>
    %138 = arith.maximumf %136, %137 : vector<16x128xf32>
    %139 = arith.mulf %133, %138 : vector<16x128xf32>
    %140 = arith.mulf %139, %139 : vector<16x128xf32>
    %141 = tpu.concatenate %127, %140 in 1 : vector<16x128xf32>, vector<16x128xf32> -> vector<16x256xf32>
    %c256_94 = arith.constant 256 : index
    %c0_95 = arith.constant 0 : index
    %142 = vector.load %arg8[%c256_94, %c0_95] : memref<640x128xf32, #tpu.memory_space<vmem>>, vector<256x128xf32>
    %cst_96 = arith.constant dense<0.000000e+00> : vector<16x128xf32>
    %143 = tpu.matmul %141, %142, %cst_96 {dimension_numbers = #tpu.dot_dimension_numbers<[1], [0], [0], [1], [0, 0, 1, 1], [], []>} : vector<16x256xf32>, vector<256x128xf32>, vector<16x128xf32> -> vector<16x128xf32>
    %c0_97 = arith.constant 0 : index
    %c0_98 = arith.constant 0 : index
    %144 = vector.load %arg10[%c0_97, %c0_98] : memref<16x128xf32, #tpu.memory_space<vmem>>, vector<16x128xf32>
    %145 = arith.addf %144, %143 : vector<16x128xf32>
    %c0_99 = arith.constant 0 : index
    %c0_100 = arith.constant 0 : index
    %146 = vector.load %arg10[%c0_99, %c0_100] : memref<16x128xf32, #tpu.memory_space<vmem>>, vector<16x128xf32>
    tpu.vector_store %arg10[%c0_99, %c0_100], %145 {strides = array<i32>} : memref<16x128xf32, #tpu.memory_space<vmem>>, vector<16x128xf32>,
    %c0_101 = arith.constant 0 : index
    %c0_102 = arith.constant 0 : index
    %147 = vector.load %arg11[%c0_101, %c0_102] : memref<16x128xf32, #tpu.memory_space<vmem>>, vector<16x128xf32>
    %c4_103 = arith.constant 4 : index
    %c0_104 = arith.constant 0 : index
    %148 = vector.load %arg6[%c4_103, %c0_104] : memref<5x128xf32, #tpu.memory_space<vmem>>, vector<1x128xf32>
    %149 = vector.broadcast %148 : vector<1x128xf32> to vector<16x128xf32>
    %150 = arith.subf %147, %149 : vector<16x128xf32>
    %cst_105 = arith.constant 0.000000e+00 : f32
    %151 = vector.broadcast %cst_105 : f32 to vector<16x128xf32>
    %152 = arith.maximumf %150, %151 : vector<16x128xf32>
    %c4_106 = arith.constant 4 : index
    %c0_107 = arith.constant 0 : index
    %153 = vector.load %arg7[%c4_106, %c0_107] : memref<5x128xf32, #tpu.memory_space<vmem>>, vector<1x128xf32>
    %154 = vector.broadcast %153 : vector<1x128xf32> to vector<16x128xf32>
    %155 = arith.subf %154, %147 : vector<16x128xf32>
    %cst_108 = arith.constant 0.000000e+00 : f32
    %156 = vector.broadcast %cst_108 : f32 to vector<16x128xf32>
    %157 = arith.maximumf %155, %156 : vector<16x128xf32>
    %158 = arith.mulf %152, %157 : vector<16x128xf32>
    %159 = arith.mulf %158, %158 : vector<16x128xf32>
    %c512_109 = arith.constant 512 : index
    %c0_110 = arith.constant 0 : index
    %160 = vector.load %arg8[%c512_109, %c0_110] : memref<640x128xf32, #tpu.memory_space<vmem>>, vector<128x128xf32>
    %cst_111 = arith.constant dense<0.000000e+00> : vector<16x128xf32>
    %161 = tpu.matmul %159, %160, %cst_111 {dimension_numbers = #tpu.dot_dimension_numbers<[1], [0], [0], [1], [0, 0, 1, 1], [], []>} : vector<16x128xf32>, vector<128x128xf32>, vector<16x128xf32> -> vector<16x128xf32>
    %c0_112 = arith.constant 0 : index
    %c0_113 = arith.constant 0 : index
    %162 = vector.load %arg10[%c0_112, %c0_113] : memref<16x128xf32, #tpu.memory_space<vmem>>, vector<16x128xf32>
    %163 = arith.addf %162, %161 : vector<16x128xf32>
    %c0_114 = arith.constant 0 : index
    %c0_115 = arith.constant 0 : index
    %164 = vector.load %arg10[%c0_114, %c0_115] : memref<16x128xf32, #tpu.memory_space<vmem>>, vector<16x128xf32>
    tpu.vector_store %arg10[%c0_114, %c0_115], %163 {strides = array<i32>} : memref<16x128xf32, #tpu.memory_space<vmem>>, vector<16x128xf32>,
    %c0_116 = arith.constant 0 : index
    %c0_117 = arith.constant 0 : index
    %165 = vector.load %arg10[%c0_116, %c0_117] : memref<16x128xf32, #tpu.memory_space<vmem>>, vector<16x128xf32>
    %c0_118 = arith.constant 0 : index
    %c0_119 = arith.constant 0 : index
    %166 = vector.load %arg9[%c0_118, %c0_119] : memref<1x128xf32, #tpu.memory_space<vmem>>, vector<1x128xf32>
    %167 = vector.broadcast %166 : vector<1x128xf32> to vector<16x128xf32>
    %168 = arith.addf %165, %167 : vector<16x128xf32>
    %c0_120 = arith.constant 0 : index
    %c0_121 = arith.constant 0 : index
    %169 = vector.load %arg10[%c0_120, %c0_121] : memref<16x128xf32, #tpu.memory_space<vmem>>, vector<16x128xf32>
    tpu.vector_store %arg10[%c0_120, %c0_121], %168 {strides = array<i32>} : memref<16x128xf32, #tpu.memory_space<vmem>>, vector<16x128xf32>,
    return
  }
  func.func @transform_0(%arg0: i32) -> (i32, i32) {
    %c0_i32 = arith.constant 0 : i32
    %c0_i32_0 = arith.constant 0 : i32
    return %arg0, %c0_i32 : i32, i32
  }
  func.func @transform_1(%arg0: i32) -> (i32, i32) {
    %c0_i32 = arith.constant 0 : i32
    %c0_i32_0 = arith.constant 0 : i32
    %c0_i32_1 = arith.constant 0 : i32
    return %c0_i32, %c0_i32_0 : i32, i32
  }
  func.func @transform_2(%arg0: i32) -> (i32, i32) {
    %c0_i32 = arith.constant 0 : i32
    %c0_i32_0 = arith.constant 0 : i32
    %c0_i32_1 = arith.constant 0 : i32
    return %c0_i32, %c0_i32_0 : i32, i32
  }
  func.func @transform_3(%arg0: i32) -> (i32, i32) {
    %c0_i32 = arith.constant 0 : i32
    %c0_i32_0 = arith.constant 0 : i32
    %c0_i32_1 = arith.constant 0 : i32
    return %c0_i32, %c0_i32_0 : i32, i32
  }
  func.func @transform_4(%arg0: i32) -> (i32, i32) {
    %c0_i32 = arith.constant 0 : i32
    %c0_i32_0 = arith.constant 0 : i32
    %c0_i32_1 = arith.constant 0 : i32
    return %c0_i32, %c0_i32_0 : i32, i32
  }
  func.func @transform_5(%arg0: i32) -> (i32, i32) {
    %c0_i32 = arith.constant 0 : i32
    %c0_i32_0 = arith.constant 0 : i32
    %c0_i32_1 = arith.constant 0 : i32
    return %c0_i32, %c0_i32_0 : i32, i32
  }
  func.func @transform_6(%arg0: i32) -> (i32, i32) {
    %c0_i32 = arith.constant 0 : i32
    %c0_i32_0 = arith.constant 0 : i32
    %c0_i32_1 = arith.constant 0 : i32
    return %c0_i32, %c0_i32_0 : i32, i32
  }
  func.func @transform_7(%arg0: i32) -> (i32, i32) {
    %c0_i32 = arith.constant 0 : i32
    %c0_i32_0 = arith.constant 0 : i32
    %c0_i32_1 = arith.constant 0 : i32
    return %c0_i32, %c0_i32_0 : i32, i32
  }
  func.func @transform_8(%arg0: i32) -> (i32, i32) {
    %c0_i32 = arith.constant 0 : i32
    %c0_i32_0 = arith.constant 0 : i32
    %c0_i32_1 = arith.constant 0 : i32
    return %c0_i32, %c0_i32_0 : i32, i32
  }
  func.func @transform_9(%arg0: i32) -> (i32, i32) {
    %c0_i32 = arith.constant 0 : i32
    %c0_i32_0 = arith.constant 0 : i32
    return %arg0, %c0_i32 : i32, i32
  }
}

</mosaic_0001>

<llo_original>
// kernel: tpu_custom_call.1
$region0: #{tpu_custom_call.1}
  #allocation0 [shape = 'u32[]', space=smem, size = 0x4, offset = 0x4, fixed_abs, tag = 'smem constant byte address 0x4 - core index']
  #allocation1 [shape = 'u32[144,128]{1,0:T(1,128)}', space=vmem, size = 0x12000, scoped, tag = 'internal scratch']
  #allocation2 [shape = 'f32[16,128]{1,0:T(8,128)}', space=vmem, size = 0x2000, scoped, tag = 'scratch operand']
  %s0 = inlined_call_operand.hbm [shape: f32[16,128], index: 0, kind: input, shape index: {}]
  %s1 = inlined_call_operand.hbm [shape: f32[5,128], index: 1, kind: input, shape index: {}]
  %s2 = inlined_call_operand.hbm [shape: f32[5,128], index: 2, kind: input, shape index: {}]
  %s3 = inlined_call_operand.hbm [shape: f32[640,128], index: 3, kind: input, shape index: {}]
  %s4 = inlined_call_operand.vmem [shape: f32[1,128], index: 4, kind: input, shape index: {}]
  %s5 = inlined_call_operand.vmem [shape: f32[5,128], index: 5, kind: input, shape index: {}]
  %s6 = inlined_call_operand.vmem [shape: f32[5,128], index: 6, kind: input, shape index: {}]
  %s7 = inlined_call_operand.hbm [shape: f32[640,128], index: 7, kind: input, shape index: {}]
  %s8 = inlined_call_operand.vmem [shape: f32[1,128], index: 8, kind: input, shape index: {}]
  %s9 = inlined_call_operand.hbm [shape: f32[16,128], index: 9, kind: output, shape index: {}]
  %s10 = sld [smem:[#allocation0]]
  $region66: #{tpu_custom_call.1} parent=0
    _
  %s12 = ssub.s32 1, %s10
  %s13 = scalar_select 0, %s12, %s10
  $region1: #{tpu_custom_call.1} parent=0
    #allocation3 [shape = 'u8[8192]{0}', space=vmem, size = 0x2000, scoped, tag = 'input window, operand 0, single buffered']
    #allocation4 [shape = 's32[1]{0}', space=sflag, size = 0x4, scoped, tag = 'scoped memory for tpu_custom_call.1']
    #allocation5 [shape = 's32[1]{0}', space=sflag, size = 0x4, scoped, tag = 'scoped memory for tpu_custom_call.1']
    #allocation6 [shape = 'u8[4096]{0}', space=vmem, size = 0x1000, scoped, tag = 'input window, operand 1, single buffered']
    #allocation7 [shape = 's32[1]{0}', space=sflag, size = 0x4, scoped, tag = 'scoped memory for tpu_custom_call.1']
    #allocation8 [shape = 'u8[4096]{0}', space=vmem, size = 0x1000, scoped, tag = 'input window, operand 2, single buffered']
    #allocation9 [shape = 'u8[327680]{0}', space=vmem, size = 0x50000, scoped, tag = 'input window, operand 3, single buffered']
    #allocation10 [shape = 's32[1]{0}', space=sflag, size = 0x4, scoped, tag = 'scoped memory for tpu_custom_call.1']
    #allocation11 [shape = 'u8[327680]{0}', space=vmem, size = 0x50000, scoped, tag = 'input window, operand 7, single buffered']
    #allocation12 [shape = 'u8[8192]{0}', space=vmem, size = 0x2000, scoped, tag = 'output window, operand 0, single buffered']
    %14 = vsyncpa [#allocation4], 0
    %15 = vsyncpa [#allocation7], 0
    %16 = vsyncpa [#allocation10], 0
    %17 = vsyncpa [#allocation5], 0
    // Predicated region
    $region2: #{tpu_custom_call.1} parent=1 // pred_check
      _
    $region3: #{tpu_custom_call.1} parent=1 // pred_check_branch
      %19 = sbr.rel (0) target = $region5
    $region4: #{tpu_custom_call.1} parent=1 // pred_region
      %s21 = ssub.s32 256, 256
      %22 = vsyncadd [#allocation4], %s21
      %s23 = sshll.u32 [#allocation3], 4
      %s24 = int_to_ptr.vmem [resolvable:$true] %s23
      %29 = dma.hbm_to_vmem [thread:$0]  %s0, 256, %s24, [#allocation4], 128, 128, 8
    $region5: #{tpu_custom_call.1} parent=1 // pred_fallthru
      _
    // Predicated region
    $region6: #{tpu_custom_call.1} parent=1 // pred_check
      _
    $region7: #{tpu_custom_call.1} parent=1 // pred_check_branch
      %31 = sbr.rel (0) target = $region9
    $region8: #{tpu_custom_call.1} parent=1 // pred_region
      %s33 = ssub.s32 128, 128
      %34 = vsyncadd [#allocation7], %s33
      %s36 = sshll.u32 [#allocation6], 4
      %s37 = int_to_ptr.vmem [resolvable:$true] %s36
      %39 = dma.hbm_to_vmem [thread:$0]  %s1, 128, %s37, [#allocation7]
    $region9: #{tpu_custom_call.1} parent=1 // pred_fallthru
      _
    // Predicated region
    $region10: #{tpu_custom_call.1} parent=1 // pred_check
      _
    $region11: #{tpu_custom_call.1} parent=1 // pred_check_branch
      %41 = sbr.rel (0) target = $region13
    $region12: #{tpu_custom_call.1} parent=1 // pred_region
      %s43 = ssub.s32 128, 128
      %44 = vsyncadd [#allocation7], %s43
      %s46 = sshll.u32 [#allocation8], 4
      %s47 = int_to_ptr.vmem [resolvable:$true] %s46
      %49 = dma.hbm_to_vmem [thread:$0]  %s2, 128, %s47, [#allocation7]
    $region13: #{tpu_custom_call.1} parent=1 // pred_fallthru
      _
    // Predicated region
    $region14: #{tpu_custom_call.1} parent=1 // pred_check
      _
    $region15: #{tpu_custom_call.1} parent=1 // pred_check_branch
      %51 = sbr.rel (0) target = $region17
    $region16: #{tpu_custom_call.1} parent=1 // pred_region
      %s53 = ssub.s32 10240, 10240
      %54 = vsyncadd [#allocation10], %s53
      %s55 = sshll.u32 [#allocation9], 4
      %s56 = int_to_ptr.vmem [resolvable:$true] %s55
      %61 = dma.hbm_to_vmem [thread:$0]  %s3, 10240, %s56, [#allocation10], 128, 128, 8
    $region17: #{tpu_custom_call.1} parent=1 // pred_fallthru
      _
    // Predicated region
    $region18: #{tpu_custom_call.1} parent=1 // pred_check
      _
    $region19: #{tpu_custom_call.1} parent=1 // pred_check_branch
      %63 = sbr.rel (0) target = $region21
    $region20: #{tpu_custom_call.1} parent=1 // pred_region
      _
    $region21: #{tpu_custom_call.1} parent=1 // pred_fallthru
      _
    // Predicated region
    $region22: #{tpu_custom_call.1} parent=1 // pred_check
      _
    $region23: #{tpu_custom_call.1} parent=1 // pred_check_branch
      %65 = sbr.rel (0) target = $region25
    $region24: #{tpu_custom_call.1} parent=1 // pred_region
      _
    $region25: #{tpu_custom_call.1} parent=1 // pred_fallthru
      _
    // Predicated region
    $region26: #{tpu_custom_call.1} parent=1 // pred_check
      _
    $region27: #{tpu_custom_call.1} parent=1 // pred_check_branch
      %67 = sbr.rel (0) target = $region29
    $region28: #{tpu_custom_call.1} parent=1 // pred_region
      _
    $region29: #{tpu_custom_call.1} parent=1 // pred_fallthru
      _
    // Predicated region
    $region30: #{tpu_custom_call.1} parent=1 // pred_check
      _
    $region31: #{tpu_custom_call.1} parent=1 // pred_check_branch
      %69 = sbr.rel (0) target = $region33
    $region32: #{tpu_custom_call.1} parent=1 // pred_region
      %s71 = ssub.s32 10240, 10240
      %72 = vsyncadd [#allocation10], %s71
      %s73 = sshll.u32 [#allocation11], 4
      %s74 = int_to_ptr.vmem [resolvable:$true] %s73
      %79 = dma.hbm_to_vmem [thread:$0]  %s7, 10240, %s74, [#allocation10], 128, 128, 8
    $region33: #{tpu_custom_call.1} parent=1 // pred_fallthru
      _
    // Predicated region
    $region34: #{tpu_custom_call.1} parent=1 // pred_check
      _
    $region35: #{tpu_custom_call.1} parent=1 // pred_check_branch
      %81 = sbr.rel (0) target = $region37
    $region36: #{tpu_custom_call.1} parent=1 // pred_region
      _
    $region37: #{tpu_custom_call.1} parent=1 // pred_fallthru
      _
    // Predicated region
    $region38: #{tpu_custom_call.1} parent=1 // pred_check
      _
    $region39: #{tpu_custom_call.1} parent=1 // pred_check_branch
      %83 = sbr.rel (0) target = $region41
    $region40: #{tpu_custom_call.1} parent=1 // pred_region
      %84 = dma.done [#allocation4], 256
    $region41: #{tpu_custom_call.1} parent=1 // pred_fallthru
      _
    // Predicated region
    $region42: #{tpu_custom_call.1} parent=1 // pred_check
      _
    $region43: #{tpu_custom_call.1} parent=1 // pred_check_branch
      %86 = sbr.rel (0) target = $region45
    $region44: #{tpu_custom_call.1} parent=1 // pred_region
      %87 = dma.done [#allocation7], 128
    $region45: #{tpu_custom_call.1} parent=1 // pred_fallthru
      _
    // Predicated region
    $region46: #{tpu_custom_call.1} parent=1 // pred_check
      _
    $region47: #{tpu_custom_call.1} parent=1 // pred_check_branch
      %89 = sbr.rel (0) target = $region49
    $region48: #{tpu_custom_call.1} parent=1 // pred_region
      %90 = dma.done [#allocation7], 128
    $region49: #{tpu_custom_call.1} parent=1 // pred_fallthru
      _
    // Predicated region
    $region50: #{tpu_custom_call.1} parent=1 // pred_check
      _
    $region51: #{tpu_custom_call.1} parent=1 // pred_check_branch
      %92 = sbr.rel (0) target = $region53
    $region52: #{tpu_custom_call.1} parent=1 // pred_region
      %93 = dma.done [#allocation10], 10240
    $region53: #{tpu_custom_call.1} parent=1 // pred_fallthru
      _
    // Predicated region
    $region54: #{tpu_custom_call.1} parent=1 // pred_check
      _
    $region55: #{tpu_custom_call.1} parent=1 // pred_check_branch
      %95 = sbr.rel (0) target = $region57
    $region56: #{tpu_custom_call.1} parent=1 // pred_region
      %96 = dma.done [#allocation10], 10240
    $region57: #{tpu_custom_call.1} parent=1 // pred_fallthru
      _
    %v97 = vld [vmem:[#allocation3] sm:$0xff]
    %v98 = vld [vmem:[#allocation3 + $0x8] sm:$0xff]
    %v99 = vld [vmem:[#allocation6] sm:$0x1]
    %v100 = vlaneseq
    %v101 = vshrl.u32 %v100, 7
    %v102 = vsub.s32 0, %v101
    %v103 = vrot.slane %v99, %v102
    %v104 = vsub.f32 %v97, %v103
    %v105 = vsub.f32 %v98, %v103
    %v106 = vmax.f32 %v104, 0.0
    %v107 = vmax.f32 %v105, 0.0
    %v108 = vld [vmem:[#allocation8] sm:$0x1]
    %v109 = vlaneseq
    %v110 = vshrl.u32 %v109, 7
    %v111 = vsub.s32 0, %v110
    %v112 = vrot.slane %v108, %v111
    %v113 = vsub.f32 %v112, %v97
    %v114 = vsub.f32 %v112, %v98
    %v115 = vmax.f32 %v113, 0.0
    %v116 = vmax.f32 %v114, 0.0
    %v117 = vmul.f32 %v106, %v115
    %v118 = vmul.f32 %v107, %v116
    %v119 = vmul.f32 %v117, %v117
    %v120 = vmul.f32 %v118, %v118
    %v121 = vld [vmem:[#allocation6 + $0x1] sm:$0x1]
    %v122 = vlaneseq
    %v123 = vshrl.u32 %v122, 7
    %v124 = vsub.s32 0, %v123
    %v125 = vrot.slane %v121, %v124
    %v126 = vsub.f32 %v97, %v125
    %v127 = vsub.f32 %v98, %v125
    %v128 = vmax.f32 %v126, 0.0
    %v129 = vmax.f32 %v127, 0.0
    %v130 = vld [vmem:[#allocation8 + $0x1] sm:$0x1]
    %v131 = vlaneseq
    %v132 = vshrl.u32 %v131, 7
    %v133 = vsub.s32 0, %v132
    %v134 = vrot.slane %v130, %v133
    %v135 = vsub.f32 %v134, %v97
    %v136 = vsub.f32 %v134, %v98
    %v137 = vmax.f32 %v135, 0.0
    %v138 = vmax.f32 %v136, 0.0
    %v139 = vmul.f32 %v128, %v137
    %v140 = vmul.f32 %v129, %v138
    %v141 = vmul.f32 %v139, %v139
    %v142 = vmul.f32 %v140, %v140
    %v143 = vld [vmem:[#allocation9] sm:$0xff]
    %v144 = vld [vmem:[#allocation9 + $0x8] sm:$0xff]
    %v145 = vld [vmem:[#allocation9 + $0x10] sm:$0xff]
    %v146 = vld [vmem:[#allocation9 + $0x18] sm:$0xff]
    %v147 = vld [vmem:[#allocation9 + $0x20] sm:$0xff]
    %v148 = vld [vmem:[#allocation9 + $0x28] sm:$0xff]
    %v149 = vld [vmem:[#allocation9 + $0x30] sm:$0xff]
    %v150 = vld [vmem:[#allocation9 + $0x38] sm:$0xff]
    %v151 = vld [vmem:[#allocation9 + $0x40] sm:$0xff]
    %v152 = vld [vmem:[#allocation9 + $0x48] sm:$0xff]
    %v153 = vld [vmem:[#allocation9 + $0x50] sm:$0xff]
    %v154 = vld [vmem:[#allocation9 + $0x58] sm:$0xff]
    %v155 = vld [vmem:[#allocation9 + $0x60] sm:$0xff]
    %v156 = vld [vmem:[#allocation9 + $0x68] sm:$0xff]
    %v157 = vld [vmem:[#allocation9 + $0x70] sm:$0xff]
    %v158 = vld [vmem:[#allocation9 + $0x78] sm:$0xff]
    %v159 = vld [vmem:[#allocation9 + $0x80] sm:$0xff]
    %v160 = vld [vmem:[#allocation9 + $0x88] sm:$0xff]
    %v161 = vld [vmem:[#allocation9 + $0x90] sm:$0xff]
    %v162 = vld [vmem:[#allocation9 + $0x98] sm:$0xff]
    %v163 = vld [vmem:[#allocation9 + $0xa0] sm:$0xff]
    %v164 = vld [vmem:[#allocation9 + $0xa8] sm:$0xff]
    %v165 = vld [vmem:[#allocation9 + $0xb0] sm:$0xff]
    %v166 = vld [vmem:[#allocation9 + $0xb8] sm:$0xff]
    %v167 = vld [vmem:[#allocation9 + $0xc0] sm:$0xff]
    %v168 = vld [vmem:[#allocation9 + $0xc8] sm:$0xff]
    %v169 = vld [vmem:[#allocation9 + $0xd0] sm:$0xff]
    %v170 = vld [vmem:[#allocation9 + $0xd8] sm:$0xff]
    %v171 = vld [vmem:[#allocation9 + $0xe0] sm:$0xff]
    %v172 = vld [vmem:[#allocation9 + $0xe8] sm:$0xff]
    %v173 = vld [vmem:[#allocation9 + $0xf0] sm:$0xff]
    %v174 = vld [vmem:[#allocation9 + $0xf8] sm:$0xff]
    %175 = vmatprep.subr.mxu0 0.0
    %176 = vmatpush1.msra.mxu0 %v143
    %177 = vmatprep.subr.mxu0 0.0
    %178 = vmatpush1.msra.mxu0 %v144
    %179 = vmatprep.subr.mxu0 0.0
    %180 = vmatpush1.msra.mxu0 %v145
    %181 = vmatprep.subr.mxu0 0.0
    %182 = vmatpush1.msra.mxu0 %v146
    %183 = vmatprep.subr.mxu0 0.0
    %184 = vmatpush1.msra.mxu0 %v147
    %185 = vmatprep.subr.mxu0 0.0
    %186 = vmatpush1.msra.mxu0 %v148
    %187 = vmatprep.subr.mxu0 0.0
    %188 = vmatpush1.msra.mxu0 %v149
    %189 = vmatprep.subr.mxu0 0.0
    %190 = vmatpush1.msra.mxu0 %v150
    %191 = vmatprep.subr.mxu0 0.0
    %192 = vmatpush1.msra.mxu0 %v151
    %193 = vmatprep.subr.mxu0 0.0
    %194 = vmatpush1.msra.mxu0 %v152
    %195 = vmatprep.subr.mxu0 0.0
    %196 = vmatpush1.msra.mxu0 %v153
    %197 = vmatprep.subr.mxu0 0.0
    %198 = vmatpush1.msra.mxu0 %v154
    %199 = vmatprep.subr.mxu0 0.0
    %200 = vmatpush1.msra.mxu0 %v155
    %201 = vmatprep.subr.mxu0 0.0
    %202 = vmatpush1.msra.mxu0 %v156
    %203 = vmatprep.subr.mxu0 0.0
    %204 = vmatpush1.msra.mxu0 %v157
    %205 = vmatprep.subr.mxu0 0.0
    %206 = vmatpush1.msra.mxu0 %v158
    %207 = vmatprep.subr.mxu0 0.0
    %208 = vmatpush1.msra.mxu0 %v159
    %209 = vmatprep.subr.mxu0 0.0
    %210 = vmatpush1.msra.mxu0 %v160
    %211 = vmatprep.subr.mxu0 0.0
    %212 = vmatpush1.msra.mxu0 %v161
    %213 = vmatprep.subr.mxu0 0.0
    %214 = vmatpush1.msra.mxu0 %v162
    %215 = vmatprep.subr.mxu0 0.0
    %216 = vmatpush1.msra.mxu0 %v163
    %217 = vmatprep.subr.mxu0 0.0
    %218 = vmatpush1.msra.mxu0 %v164
    %219 = vmatprep.subr.mxu0 0.0
    %220 = vmatpush1.msra.mxu0 %v165
    %221 = vmatprep.subr.mxu0 0.0
    %222 = vmatpush1.msra.mxu0 %v166
    %223 = vmatprep.subr.mxu0 0.0
    %224 = vmatpush1.msra.mxu0 %v167
    %225 = vmatprep.subr.mxu0 0.0
    %226 = vmatpush1.msra.mxu0 %v168
    %227 = vmatprep.subr.mxu0 0.0
    %228 = vmatpush1.msra.mxu0 %v169
    %229 = vmatprep.subr.mxu0 0.0
    %230 = vmatpush1.msra.mxu0 %v170
    %231 = vmatprep.subr.mxu0 0.0
    %232 = vmatpush1.msra.mxu0 %v171
    %233 = vmatprep.subr.mxu0 0.0
    %234 = vmatpush1.msra.mxu0 %v172
    %235 = vmatprep.subr.mxu0 0.0
    %236 = vmatpush1.msra.mxu0 %v173
    %237 = vmatprep.subr.mxu0 0.0
    %238 = vmatpush1.msra.mxu0 %v174
    %239 = vmatprep.mubr.f32.mxu0 %v141
    %240 = vmatmul.mubr.f32.gmra.mrb[0].mxu0 %v119
    %v241 = vpop.f32.mrb[0].mxu0
    %v242 = vadd.f32 0.0, %v241
    %v243 = vpop.f32.mrb[0].mxu0
    %244 = vmatprep.mubr.f32.mxu0 %v142
    %245 = vmatmul.mubr.f32.gmra.mrb[0].mxu0 %v120
    %v246 = vpop.f32.mrb[0].mxu0
    %v247 = vadd.f32 0.0, %v246
    %v248 = vpop.f32.mrb[0].mxu0
    %249 = vdwg.mxu0
    %250 = vst [vmem:[#allocation2] sm:$0xff] %v242
    %251 = vst [vmem:[#allocation2 + $0x8] sm:$0xff] %v247
    %v252 = vld [vmem:[#allocation3] sm:$0xff]
    %v253 = vld [vmem:[#allocation3 + $0x8] sm:$0xff]
    %v254 = vld [vmem:[#allocation6 + $0x2] sm:$0x1]
    %v255 = vlaneseq
    %v256 = vshrl.u32 %v255, 7
    %v257 = vsub.s32 0, %v256
    %v258 = vrot.slane %v254, %v257
    %v259 = vsub.f32 %v252, %v258
    %v260 = vsub.f32 %v253, %v258
    %v261 = vmax.f32 %v259, 0.0
    %v262 = vmax.f32 %v260, 0.0
    %v263 = vld [vmem:[#allocation8 + $0x2] sm:$0x1]
    %v264 = vlaneseq
    %v265 = vshrl.u32 %v264, 7
    %v266 = vsub.s32 0, %v265
    %v267 = vrot.slane %v263, %v266
    %v268 = vsub.f32 %v267, %v252
    %v269 = vsub.f32 %v267, %v253
    %v270 = vmax.f32 %v268, 0.0
    %v271 = vmax.f32 %v269, 0.0
    %v272 = vmul.f32 %v261, %v270
    %v273 = vmul.f32 %v262, %v271
    %v274 = vmul.f32 %v272, %v272
    %v275 = vmul.f32 %v273, %v273
    %v276 = vld [vmem:[#allocation6 + $0x3] sm:$0x1]
    %v277 = vlaneseq
    %v278 = vshrl.u32 %v277, 7
    %v279 = vsub.s32 0, %v278
    %v280 = vrot.slane %v276, %v279
    %v281 = vsub.f32 %v252, %v280
    %v282 = vsub.f32 %v253, %v280
    %v283 = vmax.f32 %v281, 0.0
    %v284 = vmax.f32 %v282, 0.0
    %v285 = vld [vmem:[#allocation8 + $0x3] sm:$0x1]
    %v286 = vlaneseq
    %v287 = vshrl.u32 %v286, 7
    %v288 = vsub.s32 0, %v287
    %v289 = vrot.slane %v285, %v288
    %v290 = vsub.f32 %v289, %v252
    %v291 = vsub.f32 %v289, %v253
    %v292 = vmax.f32 %v290, 0.0
    %v293 = vmax.f32 %v291, 0.0
    %v294 = vmul.f32 %v283, %v292
    %v295 = vmul.f32 %v284, %v293
    %v296 = vmul.f32 %v294, %v294
    %v297 = vmul.f32 %v295, %v295
    %v298 = vld [vmem:[#allocation9 + $0x100] sm:$0xff]
    %v299 = vld [vmem:[#allocation9 + $0x108] sm:$0xff]
    %v300 = vld [vmem:[#allocation9 + $0x110] sm:$0xff]
    %v301 = vld [vmem:[#allocation9 + $0x118] sm:$0xff]
    %v302 = vld [vmem:[#allocation9 + $0x120] sm:$0xff]
    %v303 = vld [vmem:[#allocation9 + $0x128] sm:$0xff]
    %v304 = vld [vmem:[#allocation9 + $0x130] sm:$0xff]
    %v305 = vld [vmem:[#allocation9 + $0x138] sm:$0xff]
    %v306 = vld [vmem:[#allocation9 + $0x140] sm:$0xff]
    %v307 = vld [vmem:[#allocation9 + $0x148] sm:$0xff]
    %v308 = vld [vmem:[#allocation9 + $0x150] sm:$0xff]
    %v309 = vld [vmem:[#allocation9 + $0x158] sm:$0xff]
    %v310 = vld [vmem:[#allocation9 + $0x160] sm:$0xff]
    %v311 = vld [vmem:[#allocation9 + $0x168] sm:$0xff]
    %v312 = vld [vmem:[#allocation9 + $0x170] sm:$0xff]
    %v313 = vld [vmem:[#allocation9 + $0x178] sm:$0xff]
    %v314 = vld [vmem:[#allocation9 + $0x180] sm:$0xff]
    %v315 = vld [vmem:[#allocation9 + $0x188] sm:$0xff]
    %v316 = vld [vmem:[#allocation9 + $0x190] sm:$0xff]
    %v317 = vld [vmem:[#allocation9 + $0x198] sm:$0xff]
    %v318 = vld [vmem:[#allocation9 + $0x1a0] sm:$0xff]
    %v319 = vld [vmem:[#allocation9 + $0x1a8] sm:$0xff]
    %v320 = vld [vmem:[#allocation9 + $0x1b0] sm:$0xff]
    %v321 = vld [vmem:[#allocation9 + $0x1b8] sm:$0xff]
    %v322 = vld [vmem:[#allocation9 + $0x1c0] sm:$0xff]
    %v323 = vld [vmem:[#allocation9 + $0x1c8] sm:$0xff]
    %v324 = vld [vmem:[#allocation9 + $0x1d0] sm:$0xff]
    %v325 = vld [vmem:[#allocation9 + $0x1d8] sm:$0xff]
    %v326 = vld [vmem:[#allocation9 + $0x1e0] sm:$0xff]
    %v327 = vld [vmem:[#allocation9 + $0x1e8] sm:$0xff]
    %v328 = vld [vmem:[#allocation9 + $0x1f0] sm:$0xff]
    %v329 = vld [vmem:[#allocation9 + $0x1f8] sm:$0xff]
    %330 = vmatprep.subr.mxu0 0.0
    %331 = vmatpush1.msra.mxu0 %v298
    %332 = vmatprep.subr.mxu0 0.0
    %333 = vmatpush1.msra.mxu0 %v299
    %334 = vmatprep.subr.mxu0 0.0
    %335 = vmatpush1.msra.mxu0 %v300
    %336 = vmatprep.subr.mxu0 0.0
    %337 = vmatpush1.msra.mxu0 %v301
    %338 = vmatprep.subr.mxu0 0.0
    %339 = vmatpush1.msra.mxu0 %v302
    %340 = vmatprep.subr.mxu0 0.0
    %341 = vmatpush1.msra.mxu0 %v303
    %342 = vmatprep.subr.mxu0 0.0
    %343 = vmatpush1.msra.mxu0 %v304
    %344 = vmatprep.subr.mxu0 0.0
    %345 = vmatpush1.msra.mxu0 %v305
    %346 = vmatprep.subr.mxu0 0.0
    %347 = vmatpush1.msra.mxu0 %v306
    %348 = vmatprep.subr.mxu0 0.0
    %349 = vmatpush1.msra.mxu0 %v307
    %350 = vmatprep.subr.mxu0 0.0
    %351 = vmatpush1.msra.mxu0 %v308
    %352 = vmatprep.subr.mxu0 0.0
    %353 = vmatpush1.msra.mxu0 %v309
    %354 = vmatprep.subr.mxu0 0.0
    %355 = vmatpush1.msra.mxu0 %v310
    %356 = vmatprep.subr.mxu0 0.0
    %357 = vmatpush1.msra.mxu0 %v311
    %358 = vmatprep.subr.mxu0 0.0
    %359 = vmatpush1.msra.mxu0 %v312
    %360 = vmatprep.subr.mxu0 0.0
    %361 = vmatpush1.msra.mxu0 %v313
    %362 = vmatprep.subr.mxu0 0.0
    %363 = vmatpush1.msra.mxu0 %v314
    %364 = vmatprep.subr.mxu0 0.0
    %365 = vmatpush1.msra.mxu0 %v315
    %366 = vmatprep.subr.mxu0 0.0
    %367 = vmatpush1.msra.mxu0 %v316
    %368 = vmatprep.subr.mxu0 0.0
    %369 = vmatpush1.msra.mxu0 %v317
    %370 = vmatprep.subr.mxu0 0.0
    %371 = vmatpush1.msra.mxu0 %v318
    %372 = vmatprep.subr.mxu0 0.0
    %373 = vmatpush1.msra.mxu0 %v319
    %374 = vmatprep.subr.mxu0 0.0
    %375 = vmatpush1.msra.mxu0 %v320
    %376 = vmatprep.subr.mxu0 0.0
    %377 = vmatpush1.msra.mxu0 %v321
    %378 = vmatprep.subr.mxu0 0.0
    %379 = vmatpush1.msra.mxu0 %v322
    %380 = vmatprep.subr.mxu0 0.0
    %381 = vmatpush1.msra.mxu0 %v323
    %382 = vmatprep.subr.mxu0 0.0
    %383 = vmatpush1.msra.mxu0 %v324
    %384 = vmatprep.subr.mxu0 0.0
    %385 = vmatpush1.msra.mxu0 %v325
    %386 = vmatprep.subr.mxu0 0.0
    %387 = vmatpush1.msra.mxu0 %v326
    %388 = vmatprep.subr.mxu0 0.0
    %389 = vmatpush1.msra.mxu0 %v327
    %390 = vmatprep.subr.mxu0 0.0
    %391 = vmatpush1.msra.mxu0 %v328
    %392 = vmatprep.subr.mxu0 0.0
    %393 = vmatpush1.msra.mxu0 %v329
    %394 = vmatprep.mubr.f32.mxu0 %v296
    %395 = vmatmul.mubr.f32.gmra.mrb[0].mxu0 %v274
    %v396 = vpop.f32.mrb[0].mxu0
    %v397 = vadd.f32 0.0, %v396
    %v398 = vpop.f32.mrb[0].mxu0
    %399 = vmatprep.mubr.f32.mxu0 %v297
    %400 = vmatmul.mubr.f32.gmra.mrb[0].mxu0 %v275
    %v401 = vpop.f32.mrb[0].mxu0
    %v402 = vadd.f32 0.0, %v401
    %v403 = vpop.f32.mrb[0].mxu0
    %404 = vdwg.mxu0
    %v405 = vld [vmem:[#allocation2] sm:$0xff]
    %v406 = vld [vmem:[#allocation2 + $0x8] sm:$0xff]
    %v407 = vadd.f32 %v405, %v397
    %v408 = vadd.f32 %v406, %v402
    %409 = vst [vmem:[#allocation2] sm:$0xff] %v407
    %410 = vst [vmem:[#allocation2 + $0x8] sm:$0xff] %v408
    %v411 = vld [vmem:[#allocation3] sm:$0xff]
    %v412 = vld [vmem:[#allocation3 + $0x8] sm:$0xff]
    %v413 = vld [vmem:[#allocation6 + $0x4] sm:$0x1]
    %v414 = vlaneseq
    %v415 = vshrl.u32 %v414, 7
    %v416 = vsub.s32 0, %v415
    %v417 = vrot.slane %v413, %v416
    %v418 = vsub.f32 %v411, %v417
    %v419 = vsub.f32 %v412, %v417
    %v420 = vmax.f32 %v418, 0.0
    %v421 = vmax.f32 %v419, 0.0
    %v422 = vld [vmem:[#allocation8 + $0x4] sm:$0x1]
    %v423 = vlaneseq
    %v424 = vshrl.u32 %v423, 7
    %v425 = vsub.s32 0, %v424
    %v426 = vrot.slane %v422, %v425
    %v427 = vsub.f32 %v426, %v411
    %v428 = vsub.f32 %v426, %v412
    %v429 = vmax.f32 %v427, 0.0
    %v430 = vmax.f32 %v428, 0.0
    %v431 = vmul.f32 %v420, %v429
    %v432 = vmul.f32 %v421, %v430
    %v433 = vmul.f32 %v431, %v431
    %v434 = vmul.f32 %v432, %v432
    %v435 = vld [vmem:[#allocation9 + $0x200] sm:$0xff]
    %v436 = vld [vmem:[#allocation9 + $0x208] sm:$0xff]
    %v437 = vld [vmem:[#allocation9 + $0x210] sm:$0xff]
    %v438 = vld [vmem:[#allocation9 + $0x218] sm:$0xff]
    %v439 = vld [vmem:[#allocation9 + $0x220] sm:$0xff]
    %v440 = vld [vmem:[#allocation9 + $0x228] sm:$0xff]
    %v441 = vld [vmem:[#allocation9 + $0x230] sm:$0xff]
    %v442 = vld [vmem:[#allocation9 + $0x238] sm:$0xff]
    %v443 = vld [vmem:[#allocation9 + $0x240] sm:$0xff]
    %v444 = vld [vmem:[#allocation9 + $0x248] sm:$0xff]
    %v445 = vld [vmem:[#allocation9 + $0x250] sm:$0xff]
    %v446 = vld [vmem:[#allocation9 + $0x258] sm:$0xff]
    %v447 = vld [vmem:[#allocation9 + $0x260] sm:$0xff]
    %v448 = vld [vmem:[#allocation9 + $0x268] sm:$0xff]
    %v449 = vld [vmem:[#allocation9 + $0x270] sm:$0xff]
    %v450 = vld [vmem:[#allocation9 + $0x278] sm:$0xff]
    %451 = vmatprep.subr.mxu0 0.0
    %452 = vmatpush1.msra.mxu0 %v435
    %453 = vmatprep.subr.mxu0 0.0
    %454 = vmatpush1.msra.mxu0 %v436
    %455 = vmatprep.subr.mxu0 0.0
    %456 = vmatpush1.msra.mxu0 %v437
    %457 = vmatprep.subr.mxu0 0.0
    %458 = vmatpush1.msra.mxu0 %v438
    %459 = vmatprep.subr.mxu0 0.0
    %460 = vmatpush1.msra.mxu0 %v439
    %461 = vmatprep.subr.mxu0 0.0
    %462 = vmatpush1.msra.mxu0 %v440
    %463 = vmatprep.subr.mxu0 0.0
    %464 = vmatpush1.msra.mxu0 %v441
    %465 = vmatprep.subr.mxu0 0.0
    %466 = vmatpush1.msra.mxu0 %v442
    %467 = vmatprep.subr.mxu0 0.0
    %468 = vmatpush1.msra.mxu0 %v443
    %469 = vmatprep.subr.mxu0 0.0
    %470 = vmatpush1.msra.mxu0 %v444
    %471 = vmatprep.subr.mxu0 0.0
    %472 = vmatpush1.msra.mxu0 %v445
    %473 = vmatprep.subr.mxu0 0.0
    %474 = vmatpush1.msra.mxu0 %v446
    %475 = vmatprep.subr.mxu0 0.0
    %476 = vmatpush1.msra.mxu0 %v447
    %477 = vmatprep.subr.mxu0 0.0
    %478 = vmatpush1.msra.mxu0 %v448
    %479 = vmatprep.subr.mxu0 0.0
    %480 = vmatpush1.msra.mxu0 %v449
    %481 = vmatprep.subr.mxu0 0.0
    %482 = vmatpush1.msra.mxu0 %v450
    %483 = vmatprep.subr.mxu0 0.0
    %484 = vmatpush1.msra.mxu0 0.0
    %485 = vmatprep.subr.mxu0 0.0
    %486 = vmatpush1.msra.mxu0 0.0
    %487 = vmatprep.subr.mxu0 0.0
    %488 = vmatpush1.msra.mxu0 0.0
    %489 = vmatprep.subr.mxu0 0.0
    %490 = vmatpush1.msra.mxu0 0.0
    %491 = vmatprep.subr.mxu0 0.0
    %492 = vmatpush1.msra.mxu0 0.0
    %493 = vmatprep.subr.mxu0 0.0
    %494 = vmatpush1.msra.mxu0 0.0
    %495 = vmatprep.subr.mxu0 0.0
    %496 = vmatpush1.msra.mxu0 0.0
    %497 = vmatprep.subr.mxu0 0.0
    %498 = vmatpush1.msra.mxu0 0.0
    %499 = vmatprep.subr.mxu0 0.0
    %500 = vmatpush1.msra.mxu0 0.0
    %501 = vmatprep.subr.mxu0 0.0
    %502 = vmatpush1.msra.mxu0 0.0
    %503 = vmatprep.subr.mxu0 0.0
    %504 = vmatpush1.msra.mxu0 0.0
    %505 = vmatprep.subr.mxu0 0.0
    %506 = vmatpush1.msra.mxu0 0.0
    %507 = vmatprep.subr.mxu0 0.0
    %508 = vmatpush1.msra.mxu0 0.0
    %509 = vmatprep.subr.mxu0 0.0
    %510 = vmatpush1.msra.mxu0 0.0
    %511 = vmatprep.subr.mxu0 0.0
    %512 = vmatpush1.msra.mxu0 0.0
    %513 = vmatprep.subr.mxu0 0.0
    %514 = vmatpush1.msra.mxu0 0.0
    %515 = vmatprep.mubr.f32.mxu0 0.0
    %516 = vmatmul.mubr.f32.gmra.mrb[0].mxu0 %v433
    %v517 = vpop.f32.mrb[0].mxu0
    %v518 = vadd.f32 0.0, %v517
    %v519 = vpop.f32.mrb[0].mxu0
    %520 = vmatprep.mubr.f32.mxu0 0.0
    %521 = vmatmul.mubr.f32.gmra.mrb[0].mxu0 %v434
    %v522 = vpop.f32.mrb[0].mxu0
    %v523 = vadd.f32 0.0, %v522
    %v524 = vpop.f32.mrb[0].mxu0
    %525 = vdwg.mxu0
    %v526 = vld [vmem:[#allocation2] sm:$0xff]
    %v527 = vld [vmem:[#allocation2 + $0x8] sm:$0xff]
    %v528 = vadd.f32 %v526, %v518
    %v529 = vadd.f32 %v527, %v523
    %530 = vst [vmem:[#allocation2] sm:$0xff] %v528
    %531 = vst [vmem:[#allocation2 + $0x8] sm:$0xff] %v529
    %v532 = vld [vmem:[#allocation2] sm:$0xff]
    %v533 = vld [vmem:[#allocation2 + $0x8] sm:$0xff]
    %v534 = vld [vmem:[%s4] sm:$0x1]
    %v536 = vlaneseq
    %v537 = vshrl.u32 %v536, 7
    %v538 = vsub.s32 0, %v537
    %v539 = vrot.slane %v534, %v538
    %v541 = vadd.f32 %v532, %v539
    %v542 = vadd.f32 %v533, %v539
    %543 = vst [vmem:[#allocation2] sm:$0xff] %v541
    %544 = vst [vmem:[#allocation2 + $0x8] sm:$0xff] %v542
    %v545 = vld [vmem:[#allocation2] sm:$0xff]
    %v546 = vld [vmem:[#allocation2 + $0x8] sm:$0xff]
    %v547 = vld [vmem:[%s5] sm:$0x1]
    %v548 = vlaneseq
    %v549 = vshrl.u32 %v548, 7
    %v550 = vsub.s32 0, %v549
    %v551 = vrot.slane %v547, %v550
    %v552 = vsub.f32 %v545, %v551
    %v553 = vsub.f32 %v546, %v551
    %v554 = vmax.f32 %v552, 0.0
    %v555 = vmax.f32 %v553, 0.0
    %v556 = vld [vmem:[%s6] sm:$0x1]
    %v557 = vlaneseq
    %v558 = vshrl.u32 %v557, 7
    %v559 = vsub.s32 0, %v558
    %v560 = vrot.slane %v556, %v559
    %v561 = vsub.f32 %v560, %v545
    %v562 = vsub.f32 %v560, %v546
    %v563 = vmax.f32 %v561, 0.0
    %v564 = vmax.f32 %v562, 0.0
    %v565 = vmul.f32 %v554, %v563
    %v566 = vmul.f32 %v555, %v564
    %v567 = vmul.f32 %v565, %v565
    %v568 = vmul.f32 %v566, %v566
    %v569 = vld [vmem:[%s5 + $0x1] sm:$0x1]
    %v570 = vlaneseq
    %v571 = vshrl.u32 %v570, 7
    %v572 = vsub.s32 0, %v571
    %v573 = vrot.slane %v569, %v572
    %v574 = vsub.f32 %v545, %v573
    %v575 = vsub.f32 %v546, %v573
    %v576 = vmax.f32 %v574, 0.0
    %v577 = vmax.f32 %v575, 0.0
    %v578 = vld [vmem:[%s6 + $0x1] sm:$0x1]
    %v579 = vlaneseq
    %v580 = vshrl.u32 %v579, 7
    %v581 = vsub.s32 0, %v580
    %v582 = vrot.slane %v578, %v581
    %v583 = vsub.f32 %v582, %v545
    %v584 = vsub.f32 %v582, %v546
    %v585 = vmax.f32 %v583, 0.0
    %v586 = vmax.f32 %v584, 0.0
    %v587 = vmul.f32 %v576, %v585
    %v588 = vmul.f32 %v577, %v586
    %v589 = vmul.f32 %v587, %v587
    %v590 = vmul.f32 %v588, %v588
    %v591 = vld [vmem:[#allocation11] sm:$0xff]
    %v592 = vld [vmem:[#allocation11 + $0x8] sm:$0xff]
    %v593 = vld [vmem:[#allocation11 + $0x10] sm:$0xff]
    %v594 = vld [vmem:[#allocation11 + $0x18] sm:$0xff]
    %v595 = vld [vmem:[#allocation11 + $0x20] sm:$0xff]
    %v596 = vld [vmem:[#allocation11 + $0x28] sm:$0xff]
    %v597 = vld [vmem:[#allocation11 + $0x30] sm:$0xff]
    %v598 = vld [vmem:[#allocation11 + $0x38] sm:$0xff]
    %v599 = vld [vmem:[#allocation11 + $0x40] sm:$0xff]
    %v600 = vld [vmem:[#allocation11 + $0x48] sm:$0xff]
    %v601 = vld [vmem:[#allocation11 + $0x50] sm:$0xff]
    %v602 = vld [vmem:[#allocation11 + $0x58] sm:$0xff]
    %v603 = vld [vmem:[#allocation11 + $0x60] sm:$0xff]
    %v604 = vld [vmem:[#allocation11 + $0x68] sm:$0xff]
    %v605 = vld [vmem:[#allocation11 + $0x70] sm:$0xff]
    %v606 = vld [vmem:[#allocation11 + $0x78] sm:$0xff]
    %v607 = vld [vmem:[#allocation11 + $0x80] sm:$0xff]
    %v608 = vld [vmem:[#allocation11 + $0x88] sm:$0xff]
    %v609 = vld [vmem:[#allocation11 + $0x90] sm:$0xff]
    %v610 = vld [vmem:[#allocation11 + $0x98] sm:$0xff]
    %v611 = vld [vmem:[#allocation11 + $0xa0] sm:$0xff]
    %v612 = vld [vmem:[#allocation11 + $0xa8] sm:$0xff]
    %v613 = vld [vmem:[#allocation11 + $0xb0] sm:$0xff]
    %v614 = vld [vmem:[#allocation11 + $0xb8] sm:$0xff]
    %v615 = vld [vmem:[#allocation11 + $0xc0] sm:$0xff]
    %v616 = vld [vmem:[#allocation11 + $0xc8] sm:$0xff]
    %v617 = vld [vmem:[#allocation11 + $0xd0] sm:$0xff]
    %v618 = vld [vmem:[#allocation11 + $0xd8] sm:$0xff]
    %v619 = vld [vmem:[#allocation11 + $0xe0] sm:$0xff]
    %v620 = vld [vmem:[#allocation11 + $0xe8] sm:$0xff]
    %v621 = vld [vmem:[#allocation11 + $0xf0] sm:$0xff]
    %v622 = vld [vmem:[#allocation11 + $0xf8] sm:$0xff]
    %623 = vmatprep.subr.mxu0 0.0
    %624 = vmatpush1.msra.mxu0 %v591
    %625 = vmatprep.subr.mxu0 0.0
    %626 = vmatpush1.msra.mxu0 %v592
    %627 = vmatprep.subr.mxu0 0.0
    %628 = vmatpush1.msra.mxu0 %v593
    %629 = vmatprep.subr.mxu0 0.0
    %630 = vmatpush1.msra.mxu0 %v594
    %631 = vmatprep.subr.mxu0 0.0
    %632 = vmatpush1.msra.mxu0 %v595
    %633 = vmatprep.subr.mxu0 0.0
    %634 = vmatpush1.msra.mxu0 %v596
    %635 = vmatprep.subr.mxu0 0.0
    %636 = vmatpush1.msra.mxu0 %v597
    %637 = vmatprep.subr.mxu0 0.0
    %638 = vmatpush1.msra.mxu0 %v598
    %639 = vmatprep.subr.mxu0 0.0
    %640 = vmatpush1.msra.mxu0 %v599
    %641 = vmatprep.subr.mxu0 0.0
    %642 = vmatpush1.msra.mxu0 %v600
    %643 = vmatprep.subr.mxu0 0.0
    %644 = vmatpush1.msra.mxu0 %v601
    %645 = vmatprep.subr.mxu0 0.0
    %646 = vmatpush1.msra.mxu0 %v602
    %647 = vmatprep.subr.mxu0 0.0
    %648 = vmatpush1.msra.mxu0 %v603
    %649 = vmatprep.subr.mxu0 0.0
    %650 = vmatpush1.msra.mxu0 %v604
    %651 = vmatprep.subr.mxu0 0.0
    %652 = vmatpush1.msra.mxu0 %v605
    %653 = vmatprep.subr.mxu0 0.0
    %654 = vmatpush1.msra.mxu0 %v606
    %655 = vmatprep.subr.mxu0 0.0
    %656 = vmatpush1.msra.mxu0 %v607
    %657 = vmatprep.subr.mxu0 0.0
    %658 = vmatpush1.msra.mxu0 %v608
    %659 = vmatprep.subr.mxu0 0.0
    %660 = vmatpush1.msra.mxu0 %v609
    %661 = vmatprep.subr.mxu0 0.0
    %662 = vmatpush1.msra.mxu0 %v610
    %663 = vmatprep.subr.mxu0 0.0
    %664 = vmatpush1.msra.mxu0 %v611
    %665 = vmatprep.subr.mxu0 0.0
    %666 = vmatpush1.msra.mxu0 %v612
    %667 = vmatprep.subr.mxu0 0.0
    %668 = vmatpush1.msra.mxu0 %v613
    %669 = vmatprep.subr.mxu0 0.0
    %670 = vmatpush1.msra.mxu0 %v614
    %671 = vmatprep.subr.mxu0 0.0
    %672 = vmatpush1.msra.mxu0 %v615
    %673 = vmatprep.subr.mxu0 0.0
    %674 = vmatpush1.msra.mxu0 %v616
    %675 = vmatprep.subr.mxu0 0.0
    %676 = vmatpush1.msra.mxu0 %v617
    %677 = vmatprep.subr.mxu0 0.0
    %678 = vmatpush1.msra.mxu0 %v618
    %679 = vmatprep.subr.mxu0 0.0
    %680 = vmatpush1.msra.mxu0 %v619
    %681 = vmatprep.subr.mxu0 0.0
    %682 = vmatpush1.msra.mxu0 %v620
    %683 = vmatprep.subr.mxu0 0.0
    %684 = vmatpush1.msra.mxu0 %v621
    %685 = vmatprep.subr.mxu0 0.0
    %686 = vmatpush1.msra.mxu0 %v622
    %687 = vmatprep.mubr.f32.mxu0 %v589
    %688 = vmatmul.mubr.f32.gmra.mrb[0].mxu0 %v567
    %v689 = vpop.f32.mrb[0].mxu0
    %v690 = vadd.f32 0.0, %v689
    %v691 = vpop.f32.mrb[0].mxu0
    %692 = vmatprep.mubr.f32.mxu0 %v590
    %693 = vmatmul.mubr.f32.gmra.mrb[0].mxu0 %v568
    %v694 = vpop.f32.mrb[0].mxu0
    %v695 = vadd.f32 0.0, %v694
    %v696 = vpop.f32.mrb[0].mxu0
    %697 = vdwg.mxu0
    %698 = vst [vmem:[#allocation12] sm:$0xff] %v690
    %699 = vst [vmem:[#allocation12 + $0x8] sm:$0xff] %v695
    %v700 = vld [vmem:[#allocation2] sm:$0xff]
    %v701 = vld [vmem:[#allocation2 + $0x8] sm:$0xff]
    %v702 = vld [vmem:[%s5 + $0x2] sm:$0x1]
    %v703 = vlaneseq
    %v704 = vshrl.u32 %v703, 7
    %v705 = vsub.s32 0, %v704
    %v706 = vrot.slane %v702, %v705
    %v707 = vsub.f32 %v700, %v706
    %v708 = vsub.f32 %v701, %v706
    %v709 = vmax.f32 %v707, 0.0
    %v710 = vmax.f32 %v708, 0.0
    %v711 = vld [vmem:[%s6 + $0x2] sm:$0x1]
    %v712 = vlaneseq
    %v713 = vshrl.u32 %v712, 7
    %v714 = vsub.s32 0, %v713
    %v715 = vrot.slane %v711, %v714
    %v716 = vsub.f32 %v715, %v700
    %v717 = vsub.f32 %v715, %v701
    %v718 = vmax.f32 %v716, 0.0
    %v719 = vmax.f32 %v717, 0.0
    %v720 = vmul.f32 %v709, %v718
    %v721 = vmul.f32 %v710, %v719
    %v722 = vmul.f32 %v720, %v720
    %v723 = vmul.f32 %v721, %v721
    %v724 = vld [vmem:[%s5 + $0x3] sm:$0x1]
    %v725 = vlaneseq
    %v726 = vshrl.u32 %v725, 7
    %v727 = vsub.s32 0, %v726
    %v728 = vrot.slane %v724, %v727
    %v729 = vsub.f32 %v700, %v728
    %v730 = vsub.f32 %v701, %v728
    %v731 = vmax.f32 %v729, 0.0
    %v732 = vmax.f32 %v730, 0.0
    %v733 = vld [vmem:[%s6 + $0x3] sm:$0x1]
    %v734 = vlaneseq
    %v735 = vshrl.u32 %v734, 7
    %v736 = vsub.s32 0, %v735
    %v737 = vrot.slane %v733, %v736
    %v738 = vsub.f32 %v737, %v700
    %v739 = vsub.f32 %v737, %v701
    %v740 = vmax.f32 %v738, 0.0
    %v741 = vmax.f32 %v739, 0.0
    %v742 = vmul.f32 %v731, %v740
    %v743 = vmul.f32 %v732, %v741
    %v744 = vmul.f32 %v742, %v742
    %v745 = vmul.f32 %v743, %v743
    %v746 = vld [vmem:[#allocation11 + $0x100] sm:$0xff]
    %v747 = vld [vmem:[#allocation11 + $0x108] sm:$0xff]
    %v748 = vld [vmem:[#allocation11 + $0x110] sm:$0xff]
    %v749 = vld [vmem:[#allocation11 + $0x118] sm:$0xff]
    %v750 = vld [vmem:[#allocation11 + $0x120] sm:$0xff]
    %v751 = vld [vmem:[#allocation11 + $0x128] sm:$0xff]
    %v752 = vld [vmem:[#allocation11 + $0x130] sm:$0xff]
    %v753 = vld [vmem:[#allocation11 + $0x138] sm:$0xff]
    %v754 = vld [vmem:[#allocation11 + $0x140] sm:$0xff]
    %v755 = vld [vmem:[#allocation11 + $0x148] sm:$0xff]
    %v756 = vld [vmem:[#allocation11 + $0x150] sm:$0xff]
    %v757 = vld [vmem:[#allocation11 + $0x158] sm:$0xff]
    %v758 = vld [vmem:[#allocation11 + $0x160] sm:$0xff]
    %v759 = vld [vmem:[#allocation11 + $0x168] sm:$0xff]
    %v760 = vld [vmem:[#allocation11 + $0x170] sm:$0xff]
    %v761 = vld [vmem:[#allocation11 + $0x178] sm:$0xff]
    %v762 = vld [vmem:[#allocation11 + $0x180] sm:$0xff]
    %v763 = vld [vmem:[#allocation11 + $0x188] sm:$0xff]
    %v764 = vld [vmem:[#allocation11 + $0x190] sm:$0xff]
    %v765 = vld [vmem:[#allocation11 + $0x198] sm:$0xff]
    %v766 = vld [vmem:[#allocation11 + $0x1a0] sm:$0xff]
    %v767 = vld [vmem:[#allocation11 + $0x1a8] sm:$0xff]
    %v768 = vld [vmem:[#allocation11 + $0x1b0] sm:$0xff]
    %v769 = vld [vmem:[#allocation11 + $0x1b8] sm:$0xff]
    %v770 = vld [vmem:[#allocation11 + $0x1c0] sm:$0xff]
    %v771 = vld [vmem:[#allocation11 + $0x1c8] sm:$0xff]
    %v772 = vld [vmem:[#allocation11 + $0x1d0] sm:$0xff]
    %v773 = vld [vmem:[#allocation11 + $0x1d8] sm:$0xff]
    %v774 = vld [vmem:[#allocation11 + $0x1e0] sm:$0xff]
    %v775 = vld [vmem:[#allocation11 + $0x1e8] sm:$0xff]
    %v776 = vld [vmem:[#allocation11 + $0x1f0] sm:$0xff]
    %v777 = vld [vmem:[#allocation11 + $0x1f8] sm:$0xff]
    %778 = vmatprep.subr.mxu0 0.0
    %779 = vmatpush1.msra.mxu0 %v746
    %780 = vmatprep.subr.mxu0 0.0
    %781 = vmatpush1.msra.mxu0 %v747
    %782 = vmatprep.subr.mxu0 0.0
    %783 = vmatpush1.msra.mxu0 %v748
    %784 = vmatprep.subr.mxu0 0.0
    %785 = vmatpush1.msra.mxu0 %v749
    %786 = vmatprep.subr.mxu0 0.0
    %787 = vmatpush1.msra.mxu0 %v750
    %788 = vmatprep.subr.mxu0 0.0
    %789 = vmatpush1.msra.mxu0 %v751
    %790 = vmatprep.subr.mxu0 0.0
    %791 = vmatpush1.msra.mxu0 %v752
    %792 = vmatprep.subr.mxu0 0.0
    %793 = vmatpush1.msra.mxu0 %v753
    %794 = vmatprep.subr.mxu0 0.0
    %795 = vmatpush1.msra.mxu0 %v754
    %796 = vmatprep.subr.mxu0 0.0
    %797 = vmatpush1.msra.mxu0 %v755
    %798 = vmatprep.subr.mxu0 0.0
    %799 = vmatpush1.msra.mxu0 %v756
    %800 = vmatprep.subr.mxu0 0.0
    %801 = vmatpush1.msra.mxu0 %v757
    %802 = vmatprep.subr.mxu0 0.0
    %803 = vmatpush1.msra.mxu0 %v758
    %804 = vmatprep.subr.mxu0 0.0
    %805 = vmatpush1.msra.mxu0 %v759
    %806 = vmatprep.subr.mxu0 0.0
    %807 = vmatpush1.msra.mxu0 %v760
    %808 = vmatprep.subr.mxu0 0.0
    %809 = vmatpush1.msra.mxu0 %v761
    %810 = vmatprep.subr.mxu0 0.0
    %811 = vmatpush1.msra.mxu0 %v762
    %812 = vmatprep.subr.mxu0 0.0
    %813 = vmatpush1.msra.mxu0 %v763
    %814 = vmatprep.subr.mxu0 0.0
    %815 = vmatpush1.msra.mxu0 %v764
    %816 = vmatprep.subr.mxu0 0.0
    %817 = vmatpush1.msra.mxu0 %v765
    %818 = vmatprep.subr.mxu0 0.0
    %819 = vmatpush1.msra.mxu0 %v766
    %820 = vmatprep.subr.mxu0 0.0
    %821 = vmatpush1.msra.mxu0 %v767
    %822 = vmatprep.subr.mxu0 0.0
    %823 = vmatpush1.msra.mxu0 %v768
    %824 = vmatprep.subr.mxu0 0.0
    %825 = vmatpush1.msra.mxu0 %v769
    %826 = vmatprep.subr.mxu0 0.0
    %827 = vmatpush1.msra.mxu0 %v770
    %828 = vmatprep.subr.mxu0 0.0
    %829 = vmatpush1.msra.mxu0 %v771
    %830 = vmatprep.subr.mxu0 0.0
    %831 = vmatpush1.msra.mxu0 %v772
    %832 = vmatprep.subr.mxu0 0.0
    %833 = vmatpush1.msra.mxu0 %v773
    %834 = vmatprep.subr.mxu0 0.0
    %835 = vmatpush1.msra.mxu0 %v774
    %836 = vmatprep.subr.mxu0 0.0
    %837 = vmatpush1.msra.mxu0 %v775
    %838 = vmatprep.subr.mxu0 0.0
    %839 = vmatpush1.msra.mxu0 %v776
    %840 = vmatprep.subr.mxu0 0.0
    %841 = vmatpush1.msra.mxu0 %v777
    %842 = vmatprep.mubr.f32.mxu0 %v744
    %843 = vmatmul.mubr.f32.gmra.mrb[0].mxu0 %v722
    %v844 = vpop.f32.mrb[0].mxu0
    %v845 = vadd.f32 0.0, %v844
    %v846 = vpop.f32.mrb[0].mxu0
    %847 = vmatprep.mubr.f32.mxu0 %v745
    %848 = vmatmul.mubr.f32.gmra.mrb[0].mxu0 %v723
    %v849 = vpop.f32.mrb[0].mxu0
    %v850 = vadd.f32 0.0, %v849
    %v851 = vpop.f32.mrb[0].mxu0
    %852 = vdwg.mxu0
    %v853 = vld [vmem:[#allocation12] sm:$0xff]
    %v854 = vld [vmem:[#allocation12 + $0x8] sm:$0xff]
    %v855 = vadd.f32 %v853, %v845
    %v856 = vadd.f32 %v854, %v850
    %857 = vst [vmem:[#allocation12] sm:$0xff] %v855
    %858 = vst [vmem:[#allocation12 + $0x8] sm:$0xff] %v856
    %v859 = vld [vmem:[#allocation2] sm:$0xff]
    %v860 = vld [vmem:[#allocation2 + $0x8] sm:$0xff]
    %v861 = vld [vmem:[%s5 + $0x4] sm:$0x1]
    %v862 = vlaneseq
    %v863 = vshrl.u32 %v862, 7
    %v864 = vsub.s32 0, %v863
    %v865 = vrot.slane %v861, %v864
    %v866 = vsub.f32 %v859, %v865
    %v867 = vsub.f32 %v860, %v865
    %v868 = vmax.f32 %v866, 0.0
    %v869 = vmax.f32 %v867, 0.0
    %v870 = vld [vmem:[%s6 + $0x4] sm:$0x1]
    %v871 = vlaneseq
    %v872 = vshrl.u32 %v871, 7
    %v873 = vsub.s32 0, %v872
    %v874 = vrot.slane %v870, %v873
    %v875 = vsub.f32 %v874, %v859
    %v876 = vsub.f32 %v874, %v860
    %v877 = vmax.f32 %v875, 0.0
    %v878 = vmax.f32 %v876, 0.0
    %v879 = vmul.f32 %v868, %v877
    %v880 = vmul.f32 %v869, %v878
    %v881 = vmul.f32 %v879, %v879
    %v882 = vmul.f32 %v880, %v880
    %v883 = vld [vmem:[#allocation11 + $0x200] sm:$0xff]
    %v884 = vld [vmem:[#allocation11 + $0x208] sm:$0xff]
    %v885 = vld [vmem:[#allocation11 + $0x210] sm:$0xff]
    %v886 = vld [vmem:[#allocation11 + $0x218] sm:$0xff]
    %v887 = vld [vmem:[#allocation11 + $0x220] sm:$0xff]
    %v888 = vld [vmem:[#allocation11 + $0x228] sm:$0xff]
    %v889 = vld [vmem:[#allocation11 + $0x230] sm:$0xff]
    %v890 = vld [vmem:[#allocation11 + $0x238] sm:$0xff]
    %v891 = vld [vmem:[#allocation11 + $0x240] sm:$0xff]
    %v892 = vld [vmem:[#allocation11 + $0x248] sm:$0xff]
    %v893 = vld [vmem:[#allocation11 + $0x250] sm:$0xff]
    %v894 = vld [vmem:[#allocation11 + $0x258] sm:$0xff]
    %v895 = vld [vmem:[#allocation11 + $0x260] sm:$0xff]
    %v896 = vld [vmem:[#allocation11 + $0x268] sm:$0xff]
    %v897 = vld [vmem:[#allocation11 + $0x270] sm:$0xff]
    %v898 = vld [vmem:[#allocation11 + $0x278] sm:$0xff]
    %899 = vmatprep.subr.mxu0 0.0
    %900 = vmatpush1.msra.mxu0 %v883
    %901 = vmatprep.subr.mxu0 0.0
    %902 = vmatpush1.msra.mxu0 %v884
    %903 = vmatprep.subr.mxu0 0.0
    %904 = vmatpush1.msra.mxu0 %v885
    %905 = vmatprep.subr.mxu0 0.0
    %906 = vmatpush1.msra.mxu0 %v886
    %907 = vmatprep.subr.mxu0 0.0
    %908 = vmatpush1.msra.mxu0 %v887
    %909 = vmatprep.subr.mxu0 0.0
    %910 = vmatpush1.msra.mxu0 %v888
    %911 = vmatprep.subr.mxu0 0.0
    %912 = vmatpush1.msra.mxu0 %v889
    %913 = vmatprep.subr.mxu0 0.0
    %914 = vmatpush1.msra.mxu0 %v890
    %915 = vmatprep.subr.mxu0 0.0
    %916 = vmatpush1.msra.mxu0 %v891
    %917 = vmatprep.subr.mxu0 0.0
    %918 = vmatpush1.msra.mxu0 %v892
    %919 = vmatprep.subr.mxu0 0.0
    %920 = vmatpush1.msra.mxu0 %v893
    %921 = vmatprep.subr.mxu0 0.0
    %922 = vmatpush1.msra.mxu0 %v894
    %923 = vmatprep.subr.mxu0 0.0
    %924 = vmatpush1.msra.mxu0 %v895
    %925 = vmatprep.subr.mxu0 0.0
    %926 = vmatpush1.msra.mxu0 %v896
    %927 = vmatprep.subr.mxu0 0.0
    %928 = vmatpush1.msra.mxu0 %v897
    %929 = vmatprep.subr.mxu0 0.0
    %930 = vmatpush1.msra.mxu0 %v898
    %931 = vmatprep.subr.mxu0 0.0
    %932 = vmatpush1.msra.mxu0 0.0
    %933 = vmatprep.subr.mxu0 0.0
    %934 = vmatpush1.msra.mxu0 0.0
    %935 = vmatprep.subr.mxu0 0.0
    %936 = vmatpush1.msra.mxu0 0.0
    %937 = vmatprep.subr.mxu0 0.0
    %938 = vmatpush1.msra.mxu0 0.0
    %939 = vmatprep.subr.mxu0 0.0
    %940 = vmatpush1.msra.mxu0 0.0
    %941 = vmatprep.subr.mxu0 0.0
    %942 = vmatpush1.msra.mxu0 0.0
    %943 = vmatprep.subr.mxu0 0.0
    %944 = vmatpush1.msra.mxu0 0.0
    %945 = vmatprep.subr.mxu0 0.0
    %946 = vmatpush1.msra.mxu0 0.0
    %947 = vmatprep.subr.mxu0 0.0
    %948 = vmatpush1.msra.mxu0 0.0
    %949 = vmatprep.subr.mxu0 0.0
    %950 = vmatpush1.msra.mxu0 0.0
    %951 = vmatprep.subr.mxu0 0.0
    %952 = vmatpush1.msra.mxu0 0.0
    %953 = vmatprep.subr.mxu0 0.0
    %954 = vmatpush1.msra.mxu0 0.0
    %955 = vmatprep.subr.mxu0 0.0
    %956 = vmatpush1.msra.mxu0 0.0
    %957 = vmatprep.subr.mxu0 0.0
    %958 = vmatpush1.msra.mxu0 0.0
    %959 = vmatprep.subr.mxu0 0.0
    %960 = vmatpush1.msra.mxu0 0.0
    %961 = vmatprep.subr.mxu0 0.0
    %962 = vmatpush1.msra.mxu0 0.0
    %963 = vmatprep.mubr.f32.mxu0 0.0
    %964 = vmatmul.mubr.f32.gmra.mrb[0].mxu0 %v881
    %v965 = vpop.f32.mrb[0].mxu0
    %v966 = vadd.f32 0.0, %v965
    %v967 = vpop.f32.mrb[0].mxu0
    %968 = vmatprep.mubr.f32.mxu0 0.0
    %969 = vmatmul.mubr.f32.gmra.mrb[0].mxu0 %v882
    %v970 = vpop.f32.mrb[0].mxu0
    %v971 = vadd.f32 0.0, %v970
    %v972 = vpop.f32.mrb[0].mxu0
    %973 = vdwg.mxu0
    %v974 = vld [vmem:[#allocation12] sm:$0xff]
    %v975 = vld [vmem:[#allocation12 + $0x8] sm:$0xff]
    %v976 = vadd.f32 %v974, %v966
    %v977 = vadd.f32 %v975, %v971
    %978 = vst [vmem:[#allocation12] sm:$0xff] %v976
    %979 = vst [vmem:[#allocation12 + $0x8] sm:$0xff] %v977
    %v980 = vld [vmem:[#allocation12] sm:$0xff]
    %v981 = vld [vmem:[#allocation12 + $0x8] sm:$0xff]
    %v982 = vld [vmem:[%s8] sm:$0x1]
    %v984 = vlaneseq
    %v985 = vshrl.u32 %v984, 7
    %v986 = vsub.s32 0, %v985
    %v987 = vrot.slane %v982, %v986
    %v989 = vadd.f32 %v980, %v987
    %v990 = vadd.f32 %v981, %v987
    %991 = vst [vmem:[#allocation12] sm:$0xff] %v989
    %992 = vst [vmem:[#allocation12 + $0x8] sm:$0xff] %v990
    // Predicated region
    $region58: #{tpu_custom_call.1} parent=1 // pred_check
      _
    $region59: #{tpu_custom_call.1} parent=1 // pred_check_branch
      %994 = sbr.rel (0) target = $region61
    $region60: #{tpu_custom_call.1} parent=1 // pred_region
      %s996 = ssub.s32 256, 256
      %997 = vsyncadd [#allocation5], %s996
      %s998 = sshll.u32 [#allocation12], 4
      %s999 = int_to_ptr.vmem [resolvable:$true] %s998
      %1004 = dma.vmem_to_hbm [thread:$0]  %s999, 256, %s9, [#allocation5], 128, 128, 8
    $region61: #{tpu_custom_call.1} parent=1 // pred_fallthru
      _
    // Predicated region
    $region62: #{tpu_custom_call.1} parent=1 // pred_check
      _
    $region63: #{tpu_custom_call.1} parent=1 // pred_check_branch
      %1006 = sbr.rel (0) target = $region65
    $region64: #{tpu_custom_call.1} parent=1 // pred_region
      %1007 = dma.done [#allocation5], 256
    $region65: #{tpu_custom_call.1} parent=1 // pred_fallthru
      _
    %1008 = vsyncpa [#allocation4], 1
    %1009 = vsyncpa [#allocation7], 1
    %1010 = vsyncpa [#allocation10], 1
    %1011 = vsyncpa [#allocation5], 1

</llo_original>
